<compile_context>
chip_gen: v6e
topology: v6e:2x2x1
jax: 0.10.0
libtpu: 0.0.40
codegen_flags: <defaults>
</compile_context>

<pallas_src>
import jax
import jax.numpy as jnp
from jax import lax
from jax.experimental import pallas as pl
from jax.experimental.pallas import tpu as pltpu


def _vmem_limit_bytes():
    """Generation-aware scoped-VMEM limit: <= 3/4 of physical VMEM, capped at 96 MiB."""
    try:
        cap = int(pltpu.get_tpu_info().vmem_capacity_bytes)
        if cap <= 0:
            raise ValueError("bad vmem capacity")
    except Exception:
        cap = 128 * 1024 * 1024
    return min((3 * cap) // 4, 96 * 1024 * 1024)


# --------------------- fused GN+SiLU + causal 3x3x3 conv kernel ---------------------


def _make_fused_kernel(mode, fuse_gn, eps, compute_dtype, H, W):
    """mode in {'plain','add','nin'}; fuse_gn: apply per-frame GroupNorm+SiLU first.

    One grid step = one (b, t) output frame.  The 3 causal time taps come from a
    rolling 3-slot VMEM buffer holding the spatial im2col of the (normalized)
    frames t, t-1, t-2, so each input frame is DMAed from HBM exactly once.
    """
    HW = H * W

    def kernel(*refs):
        idx = 0
        x_ref = refs[idx]; idx += 1
        if fuse_gn:
            g_ref, beta_ref, avg_ref = refs[idx], refs[idx + 1], refs[idx + 2]; idx += 3
        w_ref, bias_ref = refs[idx], refs[idx + 1]; idx += 2
        if mode != "plain":
            r_ref = refs[idx]; idx += 1
        if mode == "nin":
            wn_ref, bn_ref = refs[idx], refs[idx + 1]; idx += 2
        o_ref = refs[idx]; idx += 1
        buf_ref = refs[idx]

        Cin = x_ref.shape[-1]
        t = pl.program_id(1)

        # ---------------- per-frame GroupNorm (two-pass) + SiLU, f32 math ----------------
        x = x_ref[...].astype(jnp.float32).reshape(HW, Cin)
        if fuse_gn:
            # avg_ref is the (C, C) block-diagonal matrix same_group / (HW * group_size),
            # so (per-channel sums) @ avg == per-channel group mean of those sums.
            s1 = jnp.sum(x, axis=0, keepdims=True)                               # (1, C)
            mean = jnp.dot(s1, avg_ref[...], preferred_element_type=jnp.float32)  # (1, C)
            d = x - mean
            s2 = jnp.sum(d * d, axis=0, keepdims=True)
            var = jnp.dot(s2, avg_ref[...], preferred_element_type=jnp.float32)
            y = d * (lax.rsqrt(var + eps) * g_ref[...]) + beta_ref[...]
            y = y * (1.0 / (1.0 + jnp.exp(-y)))                                   # SiLU (EUP)
        else:
            y = x
        y = y.astype(compute_dtype)

        # ------------- spatial 3x3 im2col (zero pad 1), channel order (ky, kx, cin) -------------
        yf = y.reshape(H, W, Cin)
        zr = jnp.zeros((1, W, Cin), compute_dtype)
        xh = jnp.concatenate([zr, yf, zr], axis=0)                                # (H+2, W, C)
        zc = jnp.zeros((H + 2, 1, Cin), compute_dtype)
        xp = jnp.concatenate([zc, xh, zc], axis=1)                                # (H+2, W+2, C)
        xw = jnp.concatenate([xp[:, kx:kx + W, :] for kx in range(3)], axis=-1)   # (H+2, W, 3C)
        col = jnp.concatenate([xw[ky:ky + H] for ky in range(3)], axis=-1)        # (H, W, 9C)
        col = col.reshape(HW, 9 * Cin)

        # ------------- rolling 3-frame buffer; causal pad == replicate frame 0 -------------
        slot = lax.rem(t, 3)                                                      # slot of frame t
        @pl.when(jnp.logical_or(slot == 0, t == 0))
        def _():
            buf_ref[0] = col
        @pl.when(jnp.logical_or(slot == 1, t == 0))
        def _():
            buf_ref[1] = col
        @pl.when(jnp.logical_or(slot == 2, t == 0))
        def _():
            buf_ref[2] = col

        s_m2 = lax.rem(t + 1, 3)                                                  # frame t-2
        s_m1 = lax.rem(t + 2, 3)                                                  # frame t-1

        # ------------- 3 causal time-tap matmuls, K = 9*Cin, f32 accumulation -------------
        out = jnp.dot(buf_ref[s_m2], w_ref[0], preferred_element_type=jnp.float32)
        out = out + jnp.dot(buf_ref[s_m1], w_ref[1], preferred_element_type=jnp.float32)
        out = out + jnp.dot(col, w_ref[2], preferred_element_type=jnp.float32)
        out = out + bias_ref[...]

        # ------------- fused residual: identity add or 1x1x1 nin_shortcut -------------
        if mode == "add":
            out = out + r_ref[...].astype(jnp.float32)
        elif mode == "nin":
            out = out + jnp.dot(r_ref[...].astype(compute_dtype), wn_ref[...],
                                preferred_element_type=jnp.float32) + bn_ref[...]

        o_ref[...] = out.astype(o_ref.dtype)

    return kernel


def _fused_gn_silu_cconv3d(x, w, b, *, gn=None, residual=None, nin_w=None, nin_b=None,
                           num_groups=32, eps=1e-6, compute_dtype=jnp.float32,
                           out_dtype=None):
    """Optionally-fused GroupNorm+SiLU, CausalConv3d(kernel=3, stride=1), fused residual.

    x: (B, T, H, W, Cin); w: PyTorch Conv3d weight (Cout, Cin, 3, 3, 3); b: (Cout,).
    gn: (gamma, beta) to fuse GroupNorm+SiLU on x before the conv.
    residual: (B, T, H, W, Cr) added to the conv output (through nin_w/nin_b if given).
    Returns (B, T, H, W, Cout).
    """
    B, T, H, W, Cin = x.shape
    Cout = w.shape[0]
    HW = H * W
    assert w.shape[1] == Cin and w.shape[2:] == (3, 3, 3), w.shape
    out_dtype = x.dtype if out_dtype is None else out_dtype

    # (Cout, Cin, kT, kH, kW) -> (kT, kH, kW, Cin, Cout) -> (3, 9*Cin, Cout), matching
    # the im2col channel order (ky, kx, cin).  Pre-cast to compute_dtype (halves DMA).
    wr = jnp.transpose(w, (2, 3, 4, 1, 0)).reshape(3, 9 * Cin, Cout).astype(compute_dtype)
    br = b.reshape(1, Cout).astype(jnp.float32)

    fuse_gn = gn is not None
    if residual is None:
        mode = "plain"
    elif nin_w is None:
        mode = "add"
    else:
        mode = "nin"

    in_specs = [pl.BlockSpec((None, None, H, W, Cin), lambda bb, tt: (bb, tt, 0, 0, 0))]
    args = [x]

    if fuse_gn:
        gamma, beta = gn
        assert Cin % num_groups == 0, "GroupNorm requires channels divisible by num_groups"
        gs = Cin // num_groups
        gidx = jnp.arange(Cin, dtype=jnp.int32) // gs
        avg = (gidx[:, None] == gidx[None, :]).astype(jnp.float32) / float(gs * HW)
        in_specs += [pl.BlockSpec((1, Cin), lambda bb, tt: (0, 0)),
                     pl.BlockSpec((1, Cin), lambda bb, tt: (0, 0)),
                     pl.BlockSpec((Cin, Cin), lambda bb, tt: (0, 0))]
        args += [gamma.reshape(1, Cin).astype(jnp.float32),
                 beta.reshape(1, Cin).astype(jnp.float32),
                 avg]

    in_specs += [pl.BlockSpec((3, 9 * Cin, Cout), lambda bb, tt: (0, 0, 0)),
                 pl.BlockSpec((1, Cout), lambda bb, tt: (0, 0))]
    args += [wr, br]

    if mode != "plain":
        Cr = residual.shape[-1]
        rr = residual.reshape(B, T, HW, Cr)
        in_specs.append(pl.BlockSpec((None, None, HW, Cr), lambda bb, tt: (bb, tt, 0, 0)))
        args.append(rr)
    if mode == "nin":
        Cr_in = nin_w.shape[1]
        assert Cr_in == residual.shape[-1], (nin_w.shape, residual.shape)
        wn = jnp.transpose(nin_w.reshape(Cout, Cr_in), (1, 0)).astype(compute_dtype)  # (Cr, Cout)
        bn = nin_b.reshape(1, Cout).astype(jnp.float32)
        in_specs += [pl.BlockSpec((Cr_in, Cout), lambda bb, tt: (0, 0)),
                     pl.BlockSpec((1, Cout), lambda bb, tt: (0, 0))]
        args += [wn, bn]

    kernel = _make_fused_kernel(mode, fuse_gn, float(eps), compute_dtype, H, W)
    out = pl.pallas_call(
        kernel,
        out_shape=jax.ShapeDtypeStruct((B, T, HW, Cout), out_dtype),
        grid=(B, T),
        in_specs=in_specs,
        out_specs=pl.BlockSpec((None, None, HW, Cout), lambda bb, tt: (bb, tt, 0, 0)),
        scratch_shapes=[pltpu.VMEM((3, HW, 9 * Cin), compute_dtype)],   # rolling im2col buffer
        compiler_params=pltpu.CompilerParams(
            dimension_semantics=("parallel", "arbitrary"),
            vmem_limit_bytes=_vmem_limit_bytes()),
    )(*args)
    return out.reshape(B, T, H, W, Cout)


# --------------------------------- block wrapper ---------------------------------


def resnet_causal_block(x_ncthw, params, *, num_groups=32, eps=1e-6,
                        compute_dtype=jnp.bfloat16):
    """ResnetCausalBlock._forward with temb=None (inference: dropout = identity).

    compute_dtype selects the MXU operand dtype (bf16 fast path on v5e/v6e/v7x);
    accumulation is always f32.  GN/SiLU math is always f32.
    """
    B, Cin, T, H, W = x_ncthw.shape
    Cout = params["conv1_w"].shape[0]
    x = jnp.transpose(x_ncthw, (0, 2, 3, 4, 1))                 # -> (B, T, H, W, C)

    f32 = jnp.dtype(compute_dtype) == jnp.dtype(jnp.float32)
    act_dtype = x.dtype if f32 else jnp.dtype(compute_dtype)    # intermediate h storage dtype

    # GN1 + SiLU fused into conv1 (no residual).
    h = _fused_gn_silu_cconv3d(
        x, params["conv1_w"], params["conv1_b"],
        gn=(params["norm1_g"], params["norm1_b"]),
        num_groups=num_groups, eps=eps, compute_dtype=compute_dtype, out_dtype=act_dtype)
    # TODO(synk): temb path (h += temb_proj(silu(temb))[..., None, None]) not implemented;
    # this wrapper implements forward(x, temb=None) as used by the vidtok VAE.
    # Dropout is identity at inference.

    # GN2 + SiLU fused into conv2, residual add fused in the same kernel.
    if "conv_shortcut_w" in params:                             # use_conv_shortcut=True (3x3x3)
        sc = _fused_gn_silu_cconv3d(x, params["conv_shortcut_w"], params["conv_shortcut_b"],
                                    compute_dtype=compute_dtype, out_dtype=act_dtype)
        out = _fused_gn_silu_cconv3d(h, params["conv2_w"], params["conv2_b"],
                                     gn=(params["norm2_g"], params["norm2_b"]),
                                     residual=sc, num_groups=num_groups, eps=eps,
                                     compute_dtype=compute_dtype, out_dtype=x.dtype)
    elif Cin != Cout:                                           # 1x1x1 nin_shortcut, fused
        out = _fused_gn_silu_cconv3d(h, params["conv2_w"], params["conv2_b"],
                                     gn=(params["norm2_g"], params["norm2_b"]),
                                     residual=x, nin_w=params["nin_w"], nin_b=params["nin_b"],
                                     num_groups=num_groups, eps=eps,
                                     compute_dtype=compute_dtype, out_dtype=x.dtype)
    else:                                                       # identity shortcut, fused
        out = _fused_gn_silu_cconv3d(h, params["conv2_w"], params["conv2_b"],
                                     gn=(params["norm2_g"], params["norm2_b"]),
                                     residual=x, num_groups=num_groups, eps=eps,
                                     compute_dtype=compute_dtype, out_dtype=x.dtype)
    return jnp.transpose(out, (0, 4, 1, 2, 3))                  # -> (B, C, T, H, W)


# ------------------------------ pure-JAX reference ------------------------------


def _ref_resnet_causal_block(x, p, *, num_groups=32, eps=1e-6):
    def gn5(y, g, b):
        B_, C_, T_, H_, W_ = y.shape
        yr = jnp.transpose(y, (0, 2, 1, 3, 4)).reshape(B_ * T_, C_, H_, W_)
        gs = C_ // num_groups
        z = yr.reshape(B_ * T_, num_groups, gs, H_, W_)
        m = z.mean(axis=(2, 3, 4), keepdims=True)
        v = ((z - m) ** 2).mean(axis=(2, 3, 4), keepdims=True)
        z = ((z - m) / jnp.sqrt(v + eps)).reshape(B_ * T_, C_, H_, W_)
        z = z * g[None, :, None, None] + b[None, :, None, None]
        return jnp.transpose(z.reshape(B_, T_, C_, H_, W_), (0, 2, 1, 3, 4))

    def silu(v):
        return v * jax.nn.sigmoid(v)

    def cconv(y, w, b):
        kT, kH, kW = w.shape[2:]
        tp = kT - 1
        if tp > 0:
            y = jnp.concatenate([jnp.repeat(y[:, :, :1], tp, axis=2), y], axis=2)
        hp, wp = (kH - 1) // 2, (kW - 1) // 2
        y = jnp.pad(y, ((0, 0), (0, 0), (0, 0), (hp, hp), (wp, wp)))
        out = lax.conv_general_dilated(
            y, w, window_strides=(1, 1, 1), padding="VALID",
            dimension_numbers=("NCDHW", "OIDHW", "NCDHW"),
            precision=lax.Precision.HIGHEST)
        return out + b[None, :, None, None, None]

    h = cconv(silu(gn5(x, p["norm1_g"], p["norm1_b"])), p["conv1_w"], p["conv1_b"])
    h = silu(gn5(h, p["norm2_g"], p["norm2_b"]))
    h = cconv(h, p["conv2_w"], p["conv2_b"])
    sc = cconv(x, p["nin_w"], p["nin_b"]) if p.get("nin_w") is not None else x
    return sc + h


# ----------------------------------- main -----------------------------------------


if __name__ == "__main__":
    key = jax.random.PRNGKey(0)
    ks = jax.random.split(key, 12)

    # GroupNorm(num_groups=32) forces channels to be multiples of 32.
    B, Cin, Cout, T, H, W = 2, 32, 64, 4, 8, 8
    x = jax.random.normal(ks[0], (B, Cin, T, H, W), dtype=jnp.float32)

    params = {
        "norm1_g": 1.0 + 0.1 * jax.random.normal(ks[1], (Cin,), jnp.float32),
        "norm1_b": 0.1 * jax.random.normal(ks[2], (Cin,), jnp.float32),
        "conv1_w": 0.05 * jax.random.normal(ks[3], (Cout, Cin, 3, 3, 3), jnp.float32),
        "conv1_b": 0.1 * jax.random.normal(ks[4], (Cout,), jnp.float32),
        "norm2_g": 1.0 + 0.1 * jax.random.normal(ks[5], (Cout,), jnp.float32),
        "norm2_b": 0.1 * jax.random.normal(ks[6], (Cout,), jnp.float32),
        "conv2_w": 0.05 * jax.random.normal(ks[7], (Cout, Cout, 3, 3, 3), jnp.float32),
        "conv2_b": 0.1 * jax.random.normal(ks[8], (Cout,), jnp.float32),
        "nin_w": 0.1 * jax.random.normal(ks[9], (Cout, Cin, 1, 1, 1), jnp.float32),
        "nin_b": 0.1 * jax.random.normal(ks[10], (Cout,), jnp.float32),
    }

    # Path 1: in_channels != out_channels -> fused 1x1x1 nin_shortcut (f32, strict check).
    y = jax.block_until_ready(resnet_causal_block(x, params, compute_dtype=jnp.float32))
    y_ref = _ref_resnet_causal_block(x, params)
    assert y.shape == (B, Cout, T, H, W), y.shape
    err = float(jnp.max(jnp.abs(y - y_ref)))
    assert err < 1e-3, f"nin-shortcut f32 path mismatch: max abs err = {err}"

    # Path 2: in_channels == out_channels -> identity shortcut fused into conv2 (f32, strict).
    x2 = jax.random.normal(ks[11], (B, Cout, T, H, W), dtype=jnp.float32)
    params2 = {k: v for k, v in params.items() if not k.startswith("nin")}
    params2["conv1_w"] = 0.05 * jax.random.normal(ks[3], (Cout, Cout, 3, 3, 3), jnp.float32)
    params2["norm1_g"] = 1.0 + 0.1 * jax.random.normal(ks[1], (Cout,), jnp.float32)
    params2["norm1_b"] = 0.1 * jax.random.normal(ks[2], (Cout,), jnp.float32)
    y2 = jax.block_until_ready(resnet_causal_block(x2, params2, compute_dtype=jnp.float32))
    y2_ref = _ref_resnet_causal_block(x2, params2)
    assert y2.shape == (B, Cout, T, H, W), y2.shape
    err2 = float(jnp.max(jnp.abs(y2 - y2_ref)))
    assert err2 < 1e-3, f"identity-shortcut f32 path mismatch: max abs err = {err2}"

    # Path 3: bf16 MXU fast path (bf16 operands / activations, f32 accumulation) -- sanity check.
    yb = jax.block_until_ready(resnet_causal_block(x, params, compute_dtype=jnp.bfloat16))
    errb = float(jnp.max(jnp.abs(yb.astype(jnp.float32) - y_ref)))
    assert errb < 1e-1, f"bf16 path sanity check failed: max abs err = {errb}"

    print("KERNEL_OK")
</pallas_src>

<mosaic_0001>
module attributes {stable_mosaic.version = 11 : i64} {
  func.func @kernel(%arg0: i32, %arg1: i32, %arg2: memref<1x1x8x8x32xf32, #tpu.memory_space<vmem>>, %arg3: memref<1x32xf32, #tpu.memory_space<vmem>>, %arg4: memref<1x32xf32, #tpu.memory_space<vmem>>, %arg5: memref<32x32xf32, #tpu.memory_space<vmem>>, %arg6: memref<3x288x64xf32, #tpu.memory_space<vmem>>, %arg7: memref<1x64xf32, #tpu.memory_space<vmem>>, %arg8: memref<1x1x64x64xf32, #tpu.memory_space<vmem>>, %arg9: memref<3x64x288xf32, #tpu.memory_space<vmem>>) attributes {dimension_semantics = [#tpu.dimension_semantics<parallel>, #tpu.dimension_semantics<arbitrary>], iteration_bounds = array<i64: 2, 4>, scalar_prefetch = 0 : i64, scratch_operands = 1 : i64, tpu.core_type = #tpu.core_type<tc>, window_params = [{transform_indices = @transform_0, window_bounds = array<i64: 1, 1, 8, 8, 32>}, {pipeline_mode = #tpu.pipeline_mode<synchronous>, transform_indices = @transform_1, window_bounds = array<i64: 1, 32>}, {pipeline_mode = #tpu.pipeline_mode<synchronous>, transform_indices = @transform_2, window_bounds = array<i64: 1, 32>}, {pipeline_mode = #tpu.pipeline_mode<synchronous>, transform_indices = @transform_3, window_bounds = array<i64: 32, 32>}, {pipeline_mode = #tpu.pipeline_mode<synchronous>, transform_indices = @transform_4, window_bounds = array<i64: 3, 288, 64>}, {pipeline_mode = #tpu.pipeline_mode<synchronous>, transform_indices = @transform_5, window_bounds = array<i64: 1, 64>}, {transform_indices = @transform_6, window_bounds = array<i64: 1, 1, 64, 64>}]} {
    %c0 = arith.constant 0 : index
    %c0_0 = arith.constant 0 : index
    %c0_1 = arith.constant 0 : index
    %c0_2 = arith.constant 0 : index
    %c0_3 = arith.constant 0 : index
    %0 = vector.load %arg2[%c0, %c0_0, %c0_1, %c0_2, %c0_3] : memref<1x1x8x8x32xf32, #tpu.memory_space<vmem>>, vector<1x1x8x8x32xf32>
    %1 = vector.shape_cast %0 : vector<1x1x8x8x32xf32> to vector<8x8x32xf32>
    %2 = vector.shape_cast %1 : vector<8x8x32xf32> to vector<64x32xf32>
    %cst = arith.constant dense<0.000000e+00> : vector<32xf32>
    %3 = vector.multi_reduction <add>, %2, %cst [0] : vector<64x32xf32> to vector<32xf32>
    %4 = vector.shape_cast %3 : vector<32xf32> to vector<1x32xf32>
    %c0_4 = arith.constant 0 : index
    %c0_5 = arith.constant 0 : index
    %5 = vector.load %arg5[%c0_4, %c0_5] : memref<32x32xf32, #tpu.memory_space<vmem>>, vector<32x32xf32>
    %cst_6 = arith.constant dense<0.000000e+00> : vector<1x32xf32>
    %6 = tpu.matmul %4, %5, %cst_6 {dimension_numbers = #tpu.dot_dimension_numbers<[1], [0], [0], [1], [0, 0, 1, 1], [], []>} : vector<1x32xf32>, vector<32x32xf32>, vector<1x32xf32> -> vector<1x32xf32>
    %7 = vector.broadcast %6 : vector<1x32xf32> to vector<64x32xf32>
    %8 = arith.subf %2, %7 : vector<64x32xf32>
    %9 = arith.mulf %8, %8 : vector<64x32xf32>
    %cst_7 = arith.constant dense<0.000000e+00> : vector<32xf32>
    %10 = vector.multi_reduction <add>, %9, %cst_7 [0] : vector<64x32xf32> to vector<32xf32>
    %11 = vector.shape_cast %10 : vector<32xf32> to vector<1x32xf32>
    %c0_8 = arith.constant 0 : index
    %c0_9 = arith.constant 0 : index
    %12 = vector.load %arg5[%c0_8, %c0_9] : memref<32x32xf32, #tpu.memory_space<vmem>>, vector<32x32xf32>
    %cst_10 = arith.constant dense<0.000000e+00> : vector<1x32xf32>
    %13 = tpu.matmul %11, %12, %cst_10 {dimension_numbers = #tpu.dot_dimension_numbers<[1], [0], [0], [1], [0, 0, 1, 1], [], []>} : vector<1x32xf32>, vector<32x32xf32>, vector<1x32xf32> -> vector<1x32xf32>
    %cst_11 = arith.constant 9.99999997E-7 : f32
    %14 = vector.broadcast %cst_11 : f32 to vector<1x32xf32>
    %15 = arith.addf %13, %14 : vector<1x32xf32>
    %16 = math.rsqrt %15 : vector<1x32xf32>
    %c0_12 = arith.constant 0 : index
    %c0_13 = arith.constant 0 : index
    %17 = vector.load %arg3[%c0_12, %c0_13] : memref<1x32xf32, #tpu.memory_space<vmem>>, vector<1x32xf32>
    %18 = arith.mulf %16, %17 : vector<1x32xf32>
    %19 = vector.broadcast %18 : vector<1x32xf32> to vector<64x32xf32>
    %20 = arith.mulf %8, %19 : vector<64x32xf32>
    %c0_14 = arith.constant 0 : index
    %c0_15 = arith.constant 0 : index
    %21 = vector.load %arg4[%c0_14, %c0_15] : memref<1x32xf32, #tpu.memory_space<vmem>>, vector<1x32xf32>
    %22 = vector.broadcast %21 : vector<1x32xf32> to vector<64x32xf32>
    %23 = arith.addf %20, %22 : vector<64x32xf32>
    %cst_16 = arith.constant 0.000000e+00 : f32
    %24 = vector.broadcast %cst_16 : f32 to vector<64x32xf32>
    %25 = arith.subf %24, %23 : vector<64x32xf32>
    %26 = math.exp %25 : vector<64x32xf32>
    %cst_17 = arith.constant 1.000000e+00 : f32
    %27 = vector.broadcast %cst_17 : f32 to vector<64x32xf32>
    %28 = arith.addf %27, %26 : vector<64x32xf32>
    %cst_18 = arith.constant 1.000000e+00 : f32
    %29 = vector.broadcast %cst_18 : f32 to vector<64x32xf32>
    %30 = arith.divf %29, %28 : vector<64x32xf32>
    %31 = arith.mulf %23, %30 : vector<64x32xf32>
    %32 = vector.shape_cast %31 : vector<64x32xf32> to vector<8x8x32xf32>
    %cst_19 = arith.constant 0.000000e+00 : f32
    %33 = vector.broadcast %cst_19 : f32 to vector<1x8x32xf32>
    %34 = tpu.concatenate %33, %32, %33 in 0 : vector<1x8x32xf32>, vector<8x8x32xf32>, vector<1x8x32xf32> -> vector<10x8x32xf32>
    %cst_20 = arith.constant 0.000000e+00 : f32
    %35 = vector.broadcast %cst_20 : f32 to vector<10x1x32xf32>
    %36 = tpu.concatenate %35, %34, %35 in 1 : vector<10x1x32xf32>, vector<10x8x32xf32>, vector<10x1x32xf32> -> vector<10x10x32xf32>
    %37 = vector.extract_strided_slice %36 {offsets = [0, 0, 0], sizes = [10, 8, 32], strides = [1, 1, 1]} : vector<10x10x32xf32> to vector<10x8x32xf32>
    %38 = vector.extract_strided_slice %36 {offsets = [0, 1, 0], sizes = [10, 8, 32], strides = [1, 1, 1]} : vector<10x10x32xf32> to vector<10x8x32xf32>
    %39 = vector.extract_strided_slice %36 {offsets = [0, 2, 0], sizes = [10, 8, 32], strides = [1, 1, 1]} : vector<10x10x32xf32> to vector<10x8x32xf32>
    %40 = tpu.concatenate %37, %38, %39 in 2 : vector<10x8x32xf32>, vector<10x8x32xf32>, vector<10x8x32xf32> -> vector<10x8x96xf32>
    %41 = vector.extract_strided_slice %40 {offsets = [0, 0, 0], sizes = [8, 8, 96], strides = [1, 1, 1]} : vector<10x8x96xf32> to vector<8x8x96xf32>
    %42 = vector.extract_strided_slice %40 {offsets = [1, 0, 0], sizes = [8, 8, 96], strides = [1, 1, 1]} : vector<10x8x96xf32> to vector<8x8x96xf32>
    %43 = vector.extract_strided_slice %40 {offsets = [2, 0, 0], sizes = [8, 8, 96], strides = [1, 1, 1]} : vector<10x8x96xf32> to vector<8x8x96xf32>
    %44 = tpu.concatenate %41, %42, %43 in 2 : vector<8x8x96xf32>, vector<8x8x96xf32>, vector<8x8x96xf32> -> vector<8x8x288xf32>
    %45 = vector.shape_cast %44 : vector<8x8x288xf32> to vector<64x288xf32>
    %c3_i32 = arith.constant 3 : i32
    %46 = arith.remsi %arg1, %c3_i32 : i32
    %c0_i32 = arith.constant 0 : i32
    %47 = arith.cmpi eq, %46, %c0_i32 : i32
    %c0_i32_21 = arith.constant 0 : i32
    %48 = arith.cmpi eq, %arg1, %c0_i32_21 : i32
    %49 = arith.ori %47, %48 : i1
    %50 = arith.extui %49 : i1 to i32
    %c0_i32_22 = arith.constant 0 : i32
    %51 = arith.cmpi ne, %50, %c0_i32_22 : i32
    scf.if %51 {
      %c0_51 = arith.constant 0 : index
      %c0_52 = arith.constant 0 : index
      %c0_53 = arith.constant 0 : index
      %89 = vector.load %arg9[%c0_51, %c0_52, %c0_53] : memref<3x64x288xf32, #tpu.memory_space<vmem>>, vector<1x64x288xf32>
      %90 = vector.shape_cast %89 : vector<1x64x288xf32> to vector<64x288xf32>
      %91 = vector.shape_cast %45 : vector<64x288xf32> to vector<1x64x288xf32>
      tpu.vector_store %arg9[%c0_51, %c0_52, %c0_53], %91 {strides = array<i32>} : memref<3x64x288xf32, #tpu.memory_space<vmem>>, vector<1x64x288xf32>,
    } else {
    }
    %c1_i32 = arith.constant 1 : i32
    %52 = arith.cmpi eq, %46, %c1_i32 : i32
    %c0_i32_23 = arith.constant 0 : i32
    %53 = arith.cmpi eq, %arg1, %c0_i32_23 : i32
    %54 = arith.ori %52, %53 : i1
    %55 = arith.extui %54 : i1 to i32
    %c0_i32_24 = arith.constant 0 : i32
    %56 = arith.cmpi ne, %55, %c0_i32_24 : i32
    scf.if %56 {
      %c1_51 = arith.constant 1 : index
      %c0_52 = arith.constant 0 : index
      %c0_53 = arith.constant 0 : index
      %89 = vector.load %arg9[%c1_51, %c0_52, %c0_53] : memref<3x64x288xf32, #tpu.memory_space<vmem>>, vector<1x64x288xf32>
      %90 = vector.shape_cast %89 : vector<1x64x288xf32> to vector<64x288xf32>
      %91 = vector.shape_cast %45 : vector<64x288xf32> to vector<1x64x288xf32>
      tpu.vector_store %arg9[%c1_51, %c0_52, %c0_53], %91 {strides = array<i32>} : memref<3x64x288xf32, #tpu.memory_space<vmem>>, vector<1x64x288xf32>,
    } else {
    }
    %c2_i32 = arith.constant 2 : i32
    %57 = arith.cmpi eq, %46, %c2_i32 : i32
    %c0_i32_25 = arith.constant 0 : i32
    %58 = arith.cmpi eq, %arg1, %c0_i32_25 : i32
    %59 = arith.ori %57, %58 : i1
    %60 = arith.extui %59 : i1 to i32
    %c0_i32_26 = arith.constant 0 : i32
    %61 = arith.cmpi ne, %60, %c0_i32_26 : i32
    scf.if %61 {
      %c2_51 = arith.constant 2 : index
      %c0_52 = arith.constant 0 : index
      %c0_53 = arith.constant 0 : index
      %89 = vector.load %arg9[%c2_51, %c0_52, %c0_53] : memref<3x64x288xf32, #tpu.memory_space<vmem>>, vector<1x64x288xf32>
      %90 = vector.shape_cast %89 : vector<1x64x288xf32> to vector<64x288xf32>
      %91 = vector.shape_cast %45 : vector<64x288xf32> to vector<1x64x288xf32>
      tpu.vector_store %arg9[%c2_51, %c0_52, %c0_53], %91 {strides = array<i32>} : memref<3x64x288xf32, #tpu.memory_space<vmem>>, vector<1x64x288xf32>,
    } else {
    }
    %c1_i32_27 = arith.constant 1 : i32
    %62 = arith.addi %arg1, %c1_i32_27 : i32
    %c3_i32_28 = arith.constant 3 : i32
    %63 = arith.remsi %62, %c3_i32_28 : i32
    %c2_i32_29 = arith.constant 2 : i32
    %64 = arith.addi %arg1, %c2_i32_29 : i32
    %c3_i32_30 = arith.constant 3 : i32
    %65 = arith.remsi %64, %c3_i32_30 : i32
    %66 = arith.index_cast %63 : i32 to index
    %c0_31 = arith.constant 0 : index
    %c0_32 = arith.constant 0 : index
    %67 = vector.load %arg9[%66, %c0_31, %c0_32] : memref<3x64x288xf32, #tpu.memory_space<vmem>>, vector<1x64x288xf32>
    %68 = vector.shape_cast %67 : vector<1x64x288xf32> to vector<64x288xf32>
    %c0_33 = arith.constant 0 : index
    %c0_34 = arith.constant 0 : index
    %c0_35 = arith.constant 0 : index
    %69 = vector.load %arg6[%c0_33, %c0_34, %c0_35] : memref<3x288x64xf32, #tpu.memory_space<vmem>>, vector<1x288x64xf32>
    %70 = vector.shape_cast %69 : vector<1x288x64xf32> to vector<288x64xf32>
    %cst_36 = arith.constant dense<0.000000e+00> : vector<64x64xf32>
    %71 = tpu.matmul %68, %70, %cst_36 {dimension_numbers = #tpu.dot_dimension_numbers<[1], [0], [0], [1], [0, 0, 1, 1], [], []>} : vector<64x288xf32>, vector<288x64xf32>, vector<64x64xf32> -> vector<64x64xf32>
    %72 = arith.index_cast %65 : i32 to index
    %c0_37 = arith.constant 0 : index
    %c0_38 = arith.constant 0 : index
    %73 = vector.load %arg9[%72, %c0_37, %c0_38] : memref<3x64x288xf32, #tpu.memory_space<vmem>>, vector<1x64x288xf32>
    %74 = vector.shape_cast %73 : vector<1x64x288xf32> to vector<64x288xf32>
    %c1 = arith.constant 1 : index
    %c0_39 = arith.constant 0 : index
    %c0_40 = arith.constant 0 : index
    %75 = vector.load %arg6[%c1, %c0_39, %c0_40] : memref<3x288x64xf32, #tpu.memory_space<vmem>>, vector<1x288x64xf32>
    %76 = vector.shape_cast %75 : vector<1x288x64xf32> to vector<288x64xf32>
    %cst_41 = arith.constant dense<0.000000e+00> : vector<64x64xf32>
    %77 = tpu.matmul %74, %76, %cst_41 {dimension_numbers = #tpu.dot_dimension_numbers<[1], [0], [0], [1], [0, 0, 1, 1], [], []>} : vector<64x288xf32>, vector<288x64xf32>, vector<64x64xf32> -> vector<64x64xf32>
    %78 = arith.addf %71, %77 : vector<64x64xf32>
    %c2 = arith.constant 2 : index
    %c0_42 = arith.constant 0 : index
    %c0_43 = arith.constant 0 : index
    %79 = vector.load %arg6[%c2, %c0_42, %c0_43] : memref<3x288x64xf32, #tpu.memory_space<vmem>>, vector<1x288x64xf32>
    %80 = vector.shape_cast %79 : vector<1x288x64xf32> to vector<288x64xf32>
    %cst_44 = arith.constant dense<0.000000e+00> : vector<64x64xf32>
    %81 = tpu.matmul %45, %80, %cst_44 {dimension_numbers = #tpu.dot_dimension_numbers<[1], [0], [0], [1], [0, 0, 1, 1], [], []>} : vector<64x288xf32>, vector<288x64xf32>, vector<64x64xf32> -> vector<64x64xf32>
    %82 = arith.addf %78, %81 : vector<64x64xf32>
    %c0_45 = arith.constant 0 : index
    %c0_46 = arith.constant 0 : index
    %83 = vector.load %arg7[%c0_45, %c0_46] : memref<1x64xf32, #tpu.memory_space<vmem>>, vector<1x64xf32>
    %84 = vector.broadcast %83 : vector<1x64xf32> to vector<64x64xf32>
    %85 = arith.addf %82, %84 : vector<64x64xf32>
    %c0_47 = arith.constant 0 : index
    %c0_48 = arith.constant 0 : index
    %c0_49 = arith.constant 0 : index
    %c0_50 = arith.constant 0 : index
    %86 = vector.load %arg8[%c0_47, %c0_48, %c0_49, %c0_50] : memref<1x1x64x64xf32, #tpu.memory_space<vmem>>, vector<1x1x64x64xf32>
    %87 = vector.shape_cast %86 : vector<1x1x64x64xf32> to vector<64x64xf32>
    %88 = vector.shape_cast %85 : vector<64x64xf32> to vector<1x1x64x64xf32>
    tpu.vector_store %arg8[%c0_47, %c0_48, %c0_49, %c0_50], %88 {strides = array<i32>} : memref<1x1x64x64xf32, #tpu.memory_space<vmem>>, vector<1x1x64x64xf32>,
    return
  }
  func.func @transform_0(%arg0: i32, %arg1: i32) -> (i32, i32, i32, i32, i32) {
    %c0_i32 = arith.constant 0 : i32
    %c0_i32_0 = arith.constant 0 : i32
    %c0_i32_1 = arith.constant 0 : i32
    %c0_i32_2 = arith.constant 0 : i32
    return %arg0, %arg1, %c0_i32, %c0_i32_0, %c0_i32_1 : i32, i32, i32, i32, i32
  }
  func.func @transform_1(%arg0: i32, %arg1: i32) -> (i32, i32) {
    %c0_i32 = arith.constant 0 : i32
    %c0_i32_0 = arith.constant 0 : i32
    %c0_i32_1 = arith.constant 0 : i32
    return %c0_i32, %c0_i32_0 : i32, i32
  }
  func.func @transform_2(%arg0: i32, %arg1: i32) -> (i32, i32) {
    %c0_i32 = arith.constant 0 : i32
    %c0_i32_0 = arith.constant 0 : i32
    %c0_i32_1 = arith.constant 0 : i32
    return %c0_i32, %c0_i32_0 : i32, i32
  }
  func.func @transform_3(%arg0: i32, %arg1: i32) -> (i32, i32) {
    %c0_i32 = arith.constant 0 : i32
    %c0_i32_0 = arith.constant 0 : i32
    %c0_i32_1 = arith.constant 0 : i32
    return %c0_i32, %c0_i32_0 : i32, i32
  }
  func.func @transform_4(%arg0: i32, %arg1: i32) -> (i32, i32, i32) {
    %c0_i32 = arith.constant 0 : i32
    %c0_i32_0 = arith.constant 0 : i32
    %c0_i32_1 = arith.constant 0 : i32
    %c0_i32_2 = arith.constant 0 : i32
    return %c0_i32, %c0_i32_0, %c0_i32_1 : i32, i32, i32
  }
  func.func @transform_5(%arg0: i32, %arg1: i32) -> (i32, i32) {
    %c0_i32 = arith.constant 0 : i32
    %c0_i32_0 = arith.constant 0 : i32
    %c0_i32_1 = arith.constant 0 : i32
    return %c0_i32, %c0_i32_0 : i32, i32
  }
  func.func @transform_6(%arg0: i32, %arg1: i32) -> (i32, i32, i32, i32) {
    %c0_i32 = arith.constant 0 : i32
    %c0_i32_0 = arith.constant 0 : i32
    %c0_i32_1 = arith.constant 0 : i32
    return %arg0, %arg1, %c0_i32, %c0_i32_0 : i32, i32, i32, i32
  }
}

</mosaic_0001>

<llo_original>
// kernel: tpu_custom_call.1
$region0: #{tpu_custom_call.1}
  #allocation0 [shape = 'u32[]', space=smem, size = 0x4, offset = 0x4, fixed_abs, tag = 'smem constant byte address 0x4 - core index']
  #allocation1 [shape = 'u32[144,128]{1,0:T(1,128)}', space=vmem, size = 0x12000, scoped, tag = 'internal scratch']
  #allocation2 [shape = 'f32[3,64,288]{2,1,0:T(8,128)}', space=vmem, size = 0x48000, scoped, tag = 'scratch operand']
  %s0 = inlined_call_operand.vmem [shape: f32[2,4,8,8,32], index: 0, kind: input, shape index: {}]
  %s1 = inlined_call_operand.vmem [shape: f32[1,32], index: 1, kind: input, shape index: {}]
  %s2 = inlined_call_operand.vmem [shape: f32[1,32], index: 2, kind: input, shape index: {}]
  %s3 = inlined_call_operand.vmem [shape: f32[32,32], index: 3, kind: input, shape index: {}]
  %s4 = inlined_call_operand.vmem [shape: f32[3,288,64], index: 4, kind: input, shape index: {}]
  %s5 = inlined_call_operand.vmem [shape: f32[1,64], index: 5, kind: input, shape index: {}]
  %s6 = inlined_call_operand.hbm [shape: f32[2,4,64,64], index: 6, kind: output, shape index: {}]
  %s7 = sld [smem:[#allocation0]]
  $region69: #{tpu_custom_call.1} parent=0
    _
  %s9 = ssub.s32 1, %s7
  %s10 = scalar_select 0, %s9, %s7
  $region1: #{tpu_custom_call.1} parent=0
    #allocation3 [shape = 'u8[65536]{0}', space=vmem, size = 0x10000, scoped, tag = 'output window, operand 0']
    #allocation4 [shape = 's32[2]{0}', space=sflag, size = 0x8, scoped, tag = 'scoped memory for tpu_custom_call.1']
    %11 = vsyncpa [#allocation4], 0
    %s12 = scalar_lea.sflag [#allocation4], 1
    %13 = vsyncpa %s12, 0
    loop: start=0, step=1, limit=10
    $region2: #{tpu_custom_call.1} parent=1 // loop_pre_header
      _
    $region3: #{tpu_custom_call.1} parent=1 // loop_header
      %s15 = sphi 0, %s19
      %p16 = scmp.ge.s32.totalorder %s15, 10
      %s22 = sphi 0, %s34
      %s23 = sphi 0, %s30
      %s24 = sphi 0, %s22
      %s25 = sphi 0, %s23
      %s26 = sphi 0, %s24
      %s27 = sphi 0, %s25
      %s39 = sphi 0, %s41
      %s42 = sphi 0, %s39
      %s43 = sphi 0, %s42
      %s59 = sphi 0, %s43
      %s63 = sphi 0, %s63
      %s65 = sphi 0, %s63
      %s66 = sphi 0, %s65
      %s80 = sphi 0, %s66
      %s84 = sphi 0, %s84
      %s86 = sphi 0, %s84
      %s87 = sphi 0, %s86
      %s101 = sphi 0, %s87
      %s105 = sphi 0, %s105
      %s107 = sphi 0, %s105
      %s108 = sphi 0, %s107
      %s122 = sphi 0, %s108
      %s126 = sphi 0, %s126
      %s128 = sphi 0, %s126
      %s129 = sphi 0, %s128
      %s143 = sphi 0, %s129
      %s147 = sphi 0, %s147
      %s149 = sphi 0, %s147
      %s150 = sphi 0, %s149
      %s164 = sphi 0, %s150
      %s172 = sphi 0, %s174
      %s175 = sphi 0, %s172
      %s176 = sphi 0, %s175
      %s192 = sphi 0, %s176
    $region4: #{tpu_custom_call.1} parent=1 // loop_header_branch
      %18 = sbr.rel (%p16) target = $region8
    $region5: #{tpu_custom_call.1} parent=1 // loop_body
      %s20 = ssub.s32 %s15, 1
      %s21 = ssub.s32 %s15, 2
      %s28 = sadd.s32 1, %s23
      %p29 = scmp.ge.s32.totalorder %s28, 4
      %s30 = scalar_select %p29, 0, %s28
      %s31 = sadd.s32 1, %s22
      %s32 = scalar_select %p29, %s31, %s22
      %p33 = scmp.ge.s32.totalorder %s32, 2
      %s34 = scalar_select %p33, 0, %s32
      %s35 = ssub.s32 %s22, %s34
      %s36 = ssub.s32 %s23, %s30
      %s37 = sor.u32 %s35, %s36
      %p38 = scmp.eq.s32.totalorder %s37, 0
      %s40 = sadd.s32 %s39, 1
      %s41 = scalar_select %p38, %s39, %s40
      %p44 = pneg %p38
      %p45 = scmp.eq.s32.totalorder %s15, 7
      %p46 = por %p44, %p45
      %p47 = scmp.ne.s32.totalorder %s39, %s42
      %p48 = scmp.eq.s32.totalorder %s15, 0
      %p49 = por %p47, %p48
      %p50 = scmp.ne.s32.totalorder %s39, %s42
      %p51 = scmp.eq.s32.totalorder %s20, 7
      %p52 = por %p50, %p51
      %p53 = scmp.ne.s32.totalorder %s42, %s43
      %p54 = scmp.eq.s32.totalorder %s20, 0
      %p55 = por %p53, %p54
      %p56 = scmp.ne.s32.totalorder %s42, %s43
      %p57 = scmp.eq.s32.totalorder %s21, 7
      %p58 = por %p56, %p57
      %p60 = scmp.ne.s32.totalorder %s43, %s59
      %p61 = scmp.eq.s32.totalorder %s21, 0
      %p62 = por %p60, %p61
      %s64 = sadd.s32 %s63, 1
      %p67 = scmp.eq.s32.totalorder %s15, 7
      %p68 = scmp.ne.s32.totalorder %s63, %s65
      %p69 = scmp.eq.s32.totalorder %s15, 0
      %p70 = por %p68, %p69
      %p71 = scmp.ne.s32.totalorder %s63, %s65
      %p72 = scmp.eq.s32.totalorder %s20, 7
      %p73 = por %p71, %p72
      %p74 = scmp.ne.s32.totalorder %s65, %s66
      %p75 = scmp.eq.s32.totalorder %s20, 0
      %p76 = por %p74, %p75
      %p77 = scmp.ne.s32.totalorder %s65, %s66
      %p78 = scmp.eq.s32.totalorder %s21, 7
      %p79 = por %p77, %p78
      %p81 = scmp.ne.s32.totalorder %s66, %s80
      %p82 = scmp.eq.s32.totalorder %s21, 0
      %p83 = por %p81, %p82
      %s85 = sadd.s32 %s84, 1
      %p88 = scmp.eq.s32.totalorder %s15, 7
      %p89 = scmp.ne.s32.totalorder %s84, %s86
      %p90 = scmp.eq.s32.totalorder %s15, 0
      %p91 = por %p89, %p90
      %p92 = scmp.ne.s32.totalorder %s84, %s86
      %p93 = scmp.eq.s32.totalorder %s20, 7
      %p94 = por %p92, %p93
      %p95 = scmp.ne.s32.totalorder %s86, %s87
      %p96 = scmp.eq.s32.totalorder %s20, 0
      %p97 = por %p95, %p96
      %p98 = scmp.ne.s32.totalorder %s86, %s87
      %p99 = scmp.eq.s32.totalorder %s21, 7
      %p100 = por %p98, %p99
      %p102 = scmp.ne.s32.totalorder %s87, %s101
      %p103 = scmp.eq.s32.totalorder %s21, 0
      %p104 = por %p102, %p103
      %s106 = sadd.s32 %s105, 1
      %p109 = scmp.eq.s32.totalorder %s15, 7
      %p110 = scmp.ne.s32.totalorder %s105, %s107
      %p111 = scmp.eq.s32.totalorder %s15, 0
      %p112 = por %p110, %p111
      %p113 = scmp.ne.s32.totalorder %s105, %s107
      %p114 = scmp.eq.s32.totalorder %s20, 7
      %p115 = por %p113, %p114
      %p116 = scmp.ne.s32.totalorder %s107, %s108
      %p117 = scmp.eq.s32.totalorder %s20, 0
      %p118 = por %p116, %p117
      %p119 = scmp.ne.s32.totalorder %s107, %s108
      %p120 = scmp.eq.s32.totalorder %s21, 7
      %p121 = por %p119, %p120
      %p123 = scmp.ne.s32.totalorder %s108, %s122
      %p124 = scmp.eq.s32.totalorder %s21, 0
      %p125 = por %p123, %p124
      %s127 = sadd.s32 %s126, 1
      %p130 = scmp.eq.s32.totalorder %s15, 7
      %p131 = scmp.ne.s32.totalorder %s126, %s128
      %p132 = scmp.eq.s32.totalorder %s15, 0
      %p133 = por %p131, %p132
      %p134 = scmp.ne.s32.totalorder %s126, %s128
      %p135 = scmp.eq.s32.totalorder %s20, 7
      %p136 = por %p134, %p135
      %p137 = scmp.ne.s32.totalorder %s128, %s129
      %p138 = scmp.eq.s32.totalorder %s20, 0
      %p139 = por %p137, %p138
      %p140 = scmp.ne.s32.totalorder %s128, %s129
      %p141 = scmp.eq.s32.totalorder %s21, 7
      %p142 = por %p140, %p141
      %p144 = scmp.ne.s32.totalorder %s129, %s143
      %p145 = scmp.eq.s32.totalorder %s21, 0
      %p146 = por %p144, %p145
      %s148 = sadd.s32 %s147, 1
      %p151 = scmp.eq.s32.totalorder %s15, 7
      %p152 = scmp.ne.s32.totalorder %s147, %s149
      %p153 = scmp.eq.s32.totalorder %s15, 0
      %p154 = por %p152, %p153
      %p155 = scmp.ne.s32.totalorder %s147, %s149
      %p156 = scmp.eq.s32.totalorder %s20, 7
      %p157 = por %p155, %p156
      %p158 = scmp.ne.s32.totalorder %s149, %s150
      %p159 = scmp.eq.s32.totalorder %s20, 0
      %p160 = por %p158, %p159
      %p161 = scmp.ne.s32.totalorder %s149, %s150
      %p162 = scmp.eq.s32.totalorder %s21, 7
      %p163 = por %p161, %p162
      %p165 = scmp.ne.s32.totalorder %s150, %s164
      %p166 = scmp.eq.s32.totalorder %s21, 0
      %p167 = por %p165, %p166
      %s168 = ssub.s32 %s22, %s34
      %s169 = ssub.s32 %s23, %s30
      %s170 = sor.u32 %s168, %s169
      %p171 = scmp.eq.s32.totalorder %s170, 0
      %s173 = sadd.s32 %s172, 1
      %s174 = scalar_select %p171, %s172, %s173
      %p177 = pneg %p171
      %p178 = scmp.eq.s32.totalorder %s15, 7
      %p179 = por %p177, %p178
      %p180 = scmp.ne.s32.totalorder %s172, %s175
      %p181 = scmp.eq.s32.totalorder %s15, 0
      %p182 = por %p180, %p181
      %p183 = scmp.ne.s32.totalorder %s172, %s175
      %p184 = scmp.eq.s32.totalorder %s20, 7
      %p185 = por %p183, %p184
      %p186 = scmp.ne.s32.totalorder %s175, %s176
      %p187 = scmp.eq.s32.totalorder %s20, 0
      %p188 = por %p186, %p187
      %p189 = scmp.ne.s32.totalorder %s175, %s176
      %p190 = scmp.eq.s32.totalorder %s21, 7
      %p191 = por %p189, %p190
      %p193 = scmp.ne.s32.totalorder %s176, %s192
      %p194 = scmp.eq.s32.totalorder %s21, 0
      %p195 = por %p193, %p194
      %p196 = scmp.le.s32.totalorder 1, %s15
      %p197 = scmp.lt.s32.totalorder %s15, 9
      %p198 = pnand %p196, %p197
      %p199 = pneg %p198
      // Predicated region
      $region9: #{tpu_custom_call.1} parent=5 // pred_check
        _
      $region10: #{tpu_custom_call.1} parent=5 // pred_check_branch
        %201 = sbr.rel (%p198) target = $region12
      $region11: #{tpu_custom_call.1} parent=5 // pred_region
        %s202 = ssub.s32 %s15, 1
        // Predicated region
        $region13: #{tpu_custom_call.1} parent=11 // pred_check
          %p203 = pneg %p76
        $region14: #{tpu_custom_call.1} parent=11 // pred_check_branch
          %205 = sbr.rel (%p203) target = $region16
        $region15: #{tpu_custom_call.1} parent=11 // pred_region
          _
        $region16: #{tpu_custom_call.1} parent=11 // pred_fallthru
          _
        // Predicated region
        $region17: #{tpu_custom_call.1} parent=11 // pred_check
          %p206 = pneg %p97
        $region18: #{tpu_custom_call.1} parent=11 // pred_check_branch
          %208 = sbr.rel (%p206) target = $region20
        $region19: #{tpu_custom_call.1} parent=11 // pred_region
          _
        $region20: #{tpu_custom_call.1} parent=11 // pred_fallthru
          _
        // Predicated region
        $region21: #{tpu_custom_call.1} parent=11 // pred_check
          %p209 = pneg %p118
        $region22: #{tpu_custom_call.1} parent=11 // pred_check_branch
          %211 = sbr.rel (%p209) target = $region24
        $region23: #{tpu_custom_call.1} parent=11 // pred_region
          _
        $region24: #{tpu_custom_call.1} parent=11 // pred_fallthru
          _
        // Predicated region
        $region25: #{tpu_custom_call.1} parent=11 // pred_check
          %p212 = pneg %p139
        $region26: #{tpu_custom_call.1} parent=11 // pred_check_branch
          %214 = sbr.rel (%p212) target = $region28
        $region27: #{tpu_custom_call.1} parent=11 // pred_region
          _
        $region28: #{tpu_custom_call.1} parent=11 // pred_fallthru
          _
        // Predicated region
        $region29: #{tpu_custom_call.1} parent=11 // pred_check
          %p215 = pneg %p160
        $region30: #{tpu_custom_call.1} parent=11 // pred_check_branch
          %217 = sbr.rel (%p215) target = $region32
        $region31: #{tpu_custom_call.1} parent=11 // pred_region
          _
        $region32: #{tpu_custom_call.1} parent=11 // pred_fallthru
          _
      $region12: #{tpu_custom_call.1} parent=5 // pred_fallthru
        _
      %p218 = scmp.lt.s32.totalorder %s15, 8
      // Predicated region
      $region33: #{tpu_custom_call.1} parent=5 // pred_check
        %p219 = pneg %p218
      $region34: #{tpu_custom_call.1} parent=5 // pred_check_branch
        %221 = sbr.rel (%p219) target = $region36
      $region35: #{tpu_custom_call.1} parent=5 // pred_region
        // Predicated region
        $region37: #{tpu_custom_call.1} parent=35 // pred_check
          %p222 = pneg %p49
        $region38: #{tpu_custom_call.1} parent=35 // pred_check_branch
          %224 = sbr.rel (%p222) target = $region40
        $region39: #{tpu_custom_call.1} parent=35 // pred_region
          %p225 = scmp.lt.s32.totalorder %s22, 1
          %s226 = scalar_select %p225, %s22, 1
          %p227 = scmp.lt.s32.totalorder %s23, 3
          %s228 = scalar_select %p227, %s23, 3
          %s229 = smul.addr %s228, 8
          %s230 = smul.addr %s226, 32
          %s231 = sadd.s32 %s229, %s230
          %s232 = smul.addr %s231, 8
          %s233 = scalar_lea.vmem %s0, %s232
        $region40: #{tpu_custom_call.1} parent=35 // pred_fallthru
          _
      $region36: #{tpu_custom_call.1} parent=5 // pred_fallthru
        _
      %p234 = scmp.le.s32.totalorder 1, %s15
      %p235 = scmp.lt.s32.totalorder %s15, 9
      %p236 = pnand %p234, %p235
      %p237 = pneg %p236
      // Predicated region
      $region41: #{tpu_custom_call.1} parent=5 // pred_check
        _
      $region42: #{tpu_custom_call.1} parent=5 // pred_check_branch
        %239 = sbr.rel (%p236) target = $region44
      $region43: #{tpu_custom_call.1} parent=5 // pred_region
        %s240 = ssub.s32 %s15, 1
        %p241 = scmp.lt.s32.totalorder %s24, 1
        %s242 = scalar_select %p241, %s24, 1
        %p243 = scmp.lt.s32.totalorder %s25, 3
        %s244 = scalar_select %p243, %s25, 3
        %s245 = smul.addr %s244, 8
        %s246 = smul.addr %s242, 32
        %s247 = sadd.s32 %s245, %s246
        %s248 = smul.addr %s247, 8
        %s249 = scalar_lea.vmem %s0, %s248
        %p250 = pneg %p55
        %p251 = pneg %p52
        %p252 = pneg %p76
        %p253 = pneg %p73
        %p254 = pneg %p97
        %p255 = pneg %p94
        %p256 = pneg %p118
        %p257 = pneg %p115
        %p258 = pneg %p139
        %p259 = pneg %p136
        %p260 = pneg %p160
        %p261 = pneg %p157
        %p262 = pneg %p188
        %p263 = pneg %p185
        %s264 = sand.u32 %s175, 1
        %s265 = scalar_lea.sflag [#allocation4], %s264
        %s266 = sand.u32 %s175, 1
        %s267 = smul.addr %s266, 64
        %s268 = scalar_lea.vmem [#allocation3], %s267
        %p269 = scmp.lt.s32.totalorder %s24, 1
        %s270 = scalar_select %p269, %s24, 1
        %p271 = scmp.lt.s32.totalorder %s25, 3
        %s272 = scalar_select %p271, %s25, 3
        %s273 = smul.addr %s272, 8
        %s274 = smul.addr %s270, 32
        %s275 = sadd.s32 %s273, %s274
        %s276 = smul.addr %s275, 8
        %s277 = scalar_lea.vmem %s0, %s276
        %v278 = vld [vmem:[%s277] sm:$0xff]
        %v279 = vld [vmem:[%s277 + $0x8] sm:$0xff]
        %v280 = vld [vmem:[%s277 + $0x10] sm:$0xff]
        %v281 = vld [vmem:[%s277 + $0x18] sm:$0xff]
        %v282 = vld [vmem:[%s277 + $0x20] sm:$0xff]
        %v283 = vld [vmem:[%s277 + $0x28] sm:$0xff]
        %v284 = vld [vmem:[%s277 + $0x30] sm:$0xff]
        %v285 = vld [vmem:[%s277 + $0x38] sm:$0xff]
        %vm286 = vcmask 261120
        %v287 = vsel %vm286, %v278, 0.0
        %v288 = vsel %vm286, %v279, 0.0
        %v289 = vadd.f32 %v287, %v288
        %v290 = vsel %vm286, %v280, 0.0
        %v291 = vadd.f32 %v289, %v290
        %v292 = vsel %vm286, %v281, 0.0
        %v293 = vadd.f32 %v291, %v292
        %v294 = vsel %vm286, %v282, 0.0
        %v295 = vadd.f32 %v293, %v294
        %v296 = vsel %vm286, %v283, 0.0
        %v297 = vadd.f32 %v295, %v296
        %v298 = vsel %vm286, %v284, 0.0
        %v299 = vadd.f32 %v297, %v298
        %v300 = vsel %vm286, %v285, 0.0
        %v301 = vadd.f32 %v299, %v300
        %v302 = vrot.slane %v301, 4
        %v303 = vadd.f32 %v301, %v302
        %v304 = vrot.slane %v303, 2
        %v305 = vadd.f32 %v303, %v304
        %v306 = vrot.slane %v305, 1
        %v307 = vadd.f32 %v305, %v306
        %v308 = vld [vmem:[%s3] sm:$0xff]
        %v309 = vld [vmem:[%s3 + $0x8] sm:$0xff]
        %v310 = vld [vmem:[%s3 + $0x10] sm:$0xff]
        %v311 = vld [vmem:[%s3 + $0x18] sm:$0xff]
        %v313 = vsel %vm286, %v307, 0
        %315 = vmatprep.subr.mxu0 0.0
        %316 = vmatpush1.msra.mxu0 0.0
        %317 = vmatprep.subr.mxu0 0.0
        %318 = vmatpush1.msra.mxu0 0.0
        %319 = vmatprep.subr.mxu0 0.0
        %320 = vmatpush1.msra.mxu0 0.0
        %321 = vmatprep.subr.mxu0 0.0
        %322 = vmatpush1.msra.mxu0 0.0
        %323 = vmatprep.subr.mxu0 0.0
        %324 = vmatpush1.msra.mxu0 0.0
        %325 = vmatprep.subr.mxu0 0.0
        %326 = vmatpush1.msra.mxu0 0.0
        %327 = vmatprep.subr.mxu0 0.0
        %328 = vmatpush1.msra.mxu0 0.0
        %329 = vmatprep.subr.mxu0 0.0
        %330 = vmatpush1.msra.mxu0 0.0
        %331 = vmatprep.subr.mxu0 0.0
        %332 = vmatpush1.msra.mxu0 0.0
        %333 = vmatprep.subr.mxu0 0.0
        %334 = vmatpush1.msra.mxu0 0.0
        %335 = vmatprep.subr.mxu0 0.0
        %336 = vmatpush1.msra.mxu0 0.0
        %337 = vmatprep.subr.mxu0 0.0
        %338 = vmatpush1.msra.mxu0 0.0
        %339 = vmatprep.subr.mxu0 0.0
        %340 = vmatpush1.msra.mxu0 %v311
        %341 = vmatprep.subr.mxu0 0.0
        %342 = vmatpush1.msra.mxu0 %v310
        %343 = vmatprep.subr.mxu0 0.0
        %344 = vmatpush1.msra.mxu0 %v309
        %345 = vmatprep.subr.mxu0 0.0
        %346 = vmatpush1.msra.mxu0 %v308
        %347 = vmatprep.subr.mxu0 0.0
        %348 = vmatpush2.msra.mxu0 0.0
        %349 = vmatprep.subr.mxu0 0.0
        %350 = vmatpush2.msra.mxu0 0.0
        %351 = vmatprep.subr.mxu0 0.0
        %352 = vmatpush2.msra.mxu0 0.0
        %353 = vmatprep.subr.mxu0 0.0
        %354 = vmatpush2.msra.mxu0 0.0
        %355 = vmatprep.subr.mxu0 0.0
        %356 = vmatpush2.msra.mxu0 0.0
        %357 = vmatprep.subr.mxu0 0.0
        %358 = vmatpush2.msra.mxu0 0.0
        %359 = vmatprep.subr.mxu0 0.0
        %360 = vmatpush2.msra.mxu0 0.0
        %361 = vmatprep.subr.mxu0 0.0
        %362 = vmatpush2.msra.mxu0 0.0
        %363 = vmatprep.subr.mxu0 0.0
        %364 = vmatpush2.msra.mxu0 0.0
        %365 = vmatprep.subr.mxu0 0.0
        %366 = vmatpush2.msra.mxu0 0.0
        %367 = vmatprep.subr.mxu0 0.0
        %368 = vmatpush2.msra.mxu0 0.0
        %369 = vmatprep.subr.mxu0 0.0
        %370 = vmatpush2.msra.mxu0 0.0
        %371 = vmatprep.subr.mxu0 0.0
        %372 = vmatpush2.msra.mxu0 0.0
        %373 = vmatprep.subr.mxu0 0.0
        %374 = vmatpush2.msra.mxu0 0.0
        %375 = vmatprep.subr.mxu0 0.0
        %376 = vmatpush2.msra.mxu0 0.0
        %377 = vmatprep.subr.mxu0 0.0
        %378 = vmatpush2.msra.mxu0 0.0
        %379 = vmatprep.mubr.f32.mxu0 0.0
        %380 = vmatmul.mubr.f32.gmra.mxu0 %v313
        %v381 = vpop.f32.mrf.mxu0
        %v382 = vadd.f32 0.0, %v381
        %v383 = vpop.f32.mrf.mxu0
        %384 = vdwg.mxu0
        %v385 = vlaneseq
        %v386 = vshrl.u32 %v385, 7
        %v387 = vsub.s32 0, %v386
        %v388 = vrot.slane %v382, %v387
        %v389 = vsub.f32 %v278, %v388
        %v390 = vsub.f32 %v279, %v388
        %v391 = vsub.f32 %v280, %v388
        %v392 = vsub.f32 %v281, %v388
        %v393 = vsub.f32 %v282, %v388
        %v394 = vsub.f32 %v283, %v388
        %v395 = vsub.f32 %v284, %v388
        %v396 = vsub.f32 %v285, %v388
        %v397 = vmul.f32 %v389, %v389
        %v398 = vmul.f32 %v390, %v390
        %v399 = vmul.f32 %v391, %v391
        %v400 = vmul.f32 %v392, %v392
        %v401 = vmul.f32 %v393, %v393
        %v402 = vmul.f32 %v394, %v394
        %v403 = vmul.f32 %v395, %v395
        %v404 = vmul.f32 %v396, %v396
        %v405 = vsel %vm286, %v397, 0.0
        %v406 = vsel %vm286, %v398, 0.0
        %v407 = vadd.f32 %v405, %v406
        %v408 = vsel %vm286, %v399, 0.0
        %v409 = vadd.f32 %v407, %v408
        %v410 = vsel %vm286, %v400, 0.0
        %v411 = vadd.f32 %v409, %v410
        %v412 = vsel %vm286, %v401, 0.0
        %v413 = vadd.f32 %v411, %v412
        %v414 = vsel %vm286, %v402, 0.0
        %v415 = vadd.f32 %v413, %v414
        %v416 = vsel %vm286, %v403, 0.0
        %v417 = vadd.f32 %v415, %v416
        %v418 = vsel %vm286, %v404, 0.0
        %v419 = vadd.f32 %v417, %v418
        %v420 = vrot.slane %v419, 4
        %v421 = vadd.f32 %v419, %v420
        %v422 = vrot.slane %v421, 2
        %v423 = vadd.f32 %v421, %v422
        %v424 = vrot.slane %v423, 1
        %v425 = vadd.f32 %v423, %v424
        %v427 = vsel %vm286, %v425, 0
        %429 = vmatprep.subr.mxu0 0.0
        %430 = vmatpush1.msra.mxu0 0.0
        %431 = vmatprep.subr.mxu0 0.0
        %432 = vmatpush1.msra.mxu0 0.0
        %433 = vmatprep.subr.mxu0 0.0
        %434 = vmatpush1.msra.mxu0 0.0
        %435 = vmatprep.subr.mxu0 0.0
        %436 = vmatpush1.msra.mxu0 0.0
        %437 = vmatprep.subr.mxu0 0.0
        %438 = vmatpush1.msra.mxu0 0.0
        %439 = vmatprep.subr.mxu0 0.0
        %440 = vmatpush1.msra.mxu0 0.0
        %441 = vmatprep.subr.mxu0 0.0
        %442 = vmatpush1.msra.mxu0 0.0
        %443 = vmatprep.subr.mxu0 0.0
        %444 = vmatpush1.msra.mxu0 0.0
        %445 = vmatprep.subr.mxu0 0.0
        %446 = vmatpush1.msra.mxu0 0.0
        %447 = vmatprep.subr.mxu0 0.0
        %448 = vmatpush1.msra.mxu0 0.0
        %449 = vmatprep.subr.mxu0 0.0
        %450 = vmatpush1.msra.mxu0 0.0
        %451 = vmatprep.subr.mxu0 0.0
        %452 = vmatpush1.msra.mxu0 0.0
        %453 = vmatprep.subr.mxu0 0.0
        %454 = vmatpush1.msra.mxu0 %v311
        %455 = vmatprep.subr.mxu0 0.0
        %456 = vmatpush1.msra.mxu0 %v310
        %457 = vmatprep.subr.mxu0 0.0
        %458 = vmatpush1.msra.mxu0 %v309
        %459 = vmatprep.subr.mxu0 0.0
        %460 = vmatpush1.msra.mxu0 %v308
        %461 = vmatprep.subr.mxu0 0.0
        %462 = vmatpush2.msra.mxu0 0.0
        %463 = vmatprep.subr.mxu0 0.0
        %464 = vmatpush2.msra.mxu0 0.0
        %465 = vmatprep.subr.mxu0 0.0
        %466 = vmatpush2.msra.mxu0 0.0
        %467 = vmatprep.subr.mxu0 0.0
        %468 = vmatpush2.msra.mxu0 0.0
        %469 = vmatprep.subr.mxu0 0.0
        %470 = vmatpush2.msra.mxu0 0.0
        %471 = vmatprep.subr.mxu0 0.0
        %472 = vmatpush2.msra.mxu0 0.0
        %473 = vmatprep.subr.mxu0 0.0
        %474 = vmatpush2.msra.mxu0 0.0
        %475 = vmatprep.subr.mxu0 0.0
        %476 = vmatpush2.msra.mxu0 0.0
        %477 = vmatprep.subr.mxu0 0.0
        %478 = vmatpush2.msra.mxu0 0.0
        %479 = vmatprep.subr.mxu0 0.0
        %480 = vmatpush2.msra.mxu0 0.0
        %481 = vmatprep.subr.mxu0 0.0
        %482 = vmatpush2.msra.mxu0 0.0
        %483 = vmatprep.subr.mxu0 0.0
        %484 = vmatpush2.msra.mxu0 0.0
        %485 = vmatprep.subr.mxu0 0.0
        %486 = vmatpush2.msra.mxu0 0.0
        %487 = vmatprep.subr.mxu0 0.0
        %488 = vmatpush2.msra.mxu0 0.0
        %489 = vmatprep.subr.mxu0 0.0
        %490 = vmatpush2.msra.mxu0 0.0
        %491 = vmatprep.subr.mxu0 0.0
        %492 = vmatpush2.msra.mxu0 0.0
        %493 = vmatprep.mubr.f32.mxu0 0.0
        %494 = vmatmul.mubr.f32.gmra.mxu0 %v427
        %v495 = vpop.f32.mrf.mxu0
        %v496 = vadd.f32 1e-06, %v495
        %v497 = vpop.f32.mrf.mxu0
        %498 = vdwg.mxu0
        %v499 = vrsqrt.pop %v496
        %v500 = vld [vmem:[%s1] sm:$0x1]
        %v501 = vmul.f32 %v499, %v500
        %v502 = vlaneseq
        %v503 = vshrl.u32 %v502, 7
        %v504 = vsub.s32 0, %v503
        %v505 = vrot.slane %v501, %v504
        %v506 = vmul.f32 %v389, %v505
        %v507 = vmul.f32 %v390, %v505
        %v508 = vmul.f32 %v391, %v505
        %v509 = vmul.f32 %v392, %v505
        %v510 = vmul.f32 %v393, %v505
        %v511 = vmul.f32 %v394, %v505
        %v512 = vmul.f32 %v395, %v505
        %v513 = vmul.f32 %v396, %v505
        %v514 = vld [vmem:[%s2] sm:$0x1]
        %v516 = vlaneseq
        %v517 = vshrl.u32 %v516, 7
        %v518 = vsub.s32 0, %v517
        %v519 = vrot.slane %v514, %v518
        %v521 = vadd.f32 %v506, %v519
        %v522 = vadd.f32 %v507, %v519
        %v523 = vadd.f32 %v508, %v519
        %v524 = vadd.f32 %v509, %v519
        %v525 = vadd.f32 %v510, %v519
        %v526 = vadd.f32 %v511, %v519
        %v527 = vadd.f32 %v512, %v519
        %v528 = vadd.f32 %v513, %v519
        %v529 = vsub.f32 0.0, %v521
        %v530 = vsub.f32 0.0, %v522
        %v531 = vsub.f32 0.0, %v523
        %v532 = vsub.f32 0.0, %v524
        %v533 = vsub.f32 0.0, %v525
        %v534 = vsub.f32 0.0, %v526
        %v535 = vsub.f32 0.0, %v527
        %v536 = vsub.f32 0.0, %v528
        %v537 = vmul.f32 %v529, 1.442695
        %v538 = vpow.pop %v537
        %v539 = vmul.f32 %v530, 1.442695
        %v540 = vpow.pop %v539
        %v541 = vmul.f32 %v531, 1.442695
        %v542 = vpow.pop %v541
        %v543 = vmul.f32 %v532, 1.442695
        %v544 = vpow.pop %v543
        %v545 = vmul.f32 %v533, 1.442695
        %v546 = vpow.pop %v545
        %v547 = vmul.f32 %v534, 1.442695
        %v548 = vpow.pop %v547
        %v549 = vmul.f32 %v535, 1.442695
        %v550 = vpow.pop %v549
        %v551 = vmul.f32 %v536, 1.442695
        %v552 = vpow.pop %v551
        %v553 = vadd.f32 %v538, 1.0
        %v554 = vadd.f32 %v540, 1.0
        %v555 = vadd.f32 %v542, 1.0
        %v556 = vadd.f32 %v544, 1.0
        %v557 = vadd.f32 %v546, 1.0
        %v558 = vadd.f32 %v548, 1.0
        %v559 = vadd.f32 %v550, 1.0
        %v560 = vadd.f32 %v552, 1.0
        %v561 = vrcp.pop %v553
        %v562 = vmul.f32 1.0, %v561
        %v563 = vrcp.pop %v554
        %v564 = vmul.f32 1.0, %v563
        %v565 = vrcp.pop %v555
        %v566 = vmul.f32 1.0, %v565
        %v567 = vrcp.pop %v556
        %v568 = vmul.f32 1.0, %v567
        %v569 = vrcp.pop %v557
        %v570 = vmul.f32 1.0, %v569
        %v571 = vrcp.pop %v558
        %v572 = vmul.f32 1.0, %v571
        %v573 = vrcp.pop %v559
        %v574 = vmul.f32 1.0, %v573
        %v575 = vrcp.pop %v560
        %v576 = vmul.f32 1.0, %v575
        %v577 = vmul.f32 %v521, %v562
        %v578 = vmul.f32 %v522, %v564
        %v579 = vmul.f32 %v523, %v566
        %v580 = vmul.f32 %v524, %v568
        %v581 = vmul.f32 %v525, %v570
        %v582 = vmul.f32 %v526, %v572
        %v583 = vmul.f32 %v527, %v574
        %v584 = vmul.f32 %v528, %v576
        %v594 = vrot.slane 0.0, 7
        %v595 = vrot.slane %v577, 7
        %v596 = vrot.slane %v578, 7
        %v597 = vrot.slane %v579, 7
        %v598 = vrot.slane %v580, 7
        %v599 = vrot.slane %v581, 7
        %v600 = vrot.slane %v582, 7
        %v601 = vrot.slane %v583, 7
        %v602 = vrot.slane %v584, 7
        %vm612 = vcmask 1040384
        %v613 = vsel %vm612, 0.0, %v594
        %v614 = vsel %vm612, 0.0, %v595
        %v615 = vsel %vm612, 0.0, %v596
        %v616 = vsel %vm612, 0.0, %v597
        %v617 = vsel %vm612, 0.0, %v598
        %v618 = vsel %vm612, 0.0, %v599
        %v619 = vsel %vm612, 0.0, %v600
        %v620 = vsel %vm612, 0.0, %v601
        %v621 = vsel %vm612, 0.0, %v602
        %v622 = vsel %vm612, %v594, 0.0
        %v623 = vsel %vm612, %v595, 0.0
        %v624 = vsel %vm612, %v596, 0.0
        %v625 = vsel %vm612, %v597, 0.0
        %v626 = vsel %vm612, %v598, 0.0
        %v627 = vsel %vm612, %v599, 0.0
        %v628 = vsel %vm612, %v600, 0.0
        %v629 = vsel %vm612, %v601, 0.0
        %v630 = vsel %vm612, %v602, 0.0
        %vm649 = vcmask 1046528
        %v650 = vrot.slane %v613, 1
        %v651 = vrot.slane %v622, 1
        %v652 = vsel %vm649, %v650, %v651
        %v653 = vrot.slane %v614, 1
        %v654 = vrot.slane %v623, 1
        %v655 = vsel %vm649, %v653, %v654
        %v656 = vrot.slane %v615, 1
        %v657 = vrot.slane %v624, 1
        %v658 = vsel %vm649, %v656, %v657
        %v659 = vrot.slane %v616, 1
        %v660 = vrot.slane %v625, 1
        %v661 = vsel %vm649, %v659, %v660
        %v662 = vrot.slane %v617, 1
        %v663 = vrot.slane %v626, 1
        %v664 = vsel %vm649, %v662, %v663
        %v665 = vrot.slane %v618, 1
        %v666 = vrot.slane %v627, 1
        %v667 = vsel %vm649, %v665, %v666
        %v668 = vrot.slane %v619, 1
        %v669 = vrot.slane %v628, 1
        %v670 = vsel %vm649, %v668, %v669
        %v671 = vrot.slane %v620, 1
        %v672 = vrot.slane %v629, 1
        %v673 = vsel %vm649, %v671, %v672
        %v674 = vrot.slane %v621, 1
        %v675 = vrot.slane %v630, 1
        %v676 = vsel %vm649, %v674, %v675
        %677 = vrot.lane.b32.xlu0 %v652, 32
        %v678 = vpop.permute.xlu0 %677
        %679 = vrot.lane.b32.xlu0 %v655, 32
        %v680 = vpop.permute.xlu0 %679
        %681 = vrot.lane.b32.xlu0 %v658, 32
        %v682 = vpop.permute.xlu0 %681
        %683 = vrot.lane.b32.xlu0 %v661, 32
        %v684 = vpop.permute.xlu0 %683
        %685 = vrot.lane.b32.xlu0 %v664, 32
        %v686 = vpop.permute.xlu0 %685
        %687 = vrot.lane.b32.xlu0 %v667, 32
        %v688 = vpop.permute.xlu0 %687
        %689 = vrot.lane.b32.xlu0 %v670, 32
        %v690 = vpop.permute.xlu0 %689
        %691 = vrot.lane.b32.xlu0 %v673, 32
        %v692 = vpop.permute.xlu0 %691
        %693 = vrot.lane.b32.xlu0 %v676, 32
        %v694 = vpop.permute.xlu0 %693
        %vm704 = vcmask 1045504
        %v705 = vrot.slane %v613, 2
        %v706 = vrot.slane %v622, 2
        %v707 = vsel %vm704, %v705, %v706
        %v708 = vrot.slane %v614, 2
        %v709 = vrot.slane %v623, 2
        %v710 = vsel %vm704, %v708, %v709
        %v711 = vrot.slane %v615, 2
        %v712 = vrot.slane %v624, 2
        %v713 = vsel %vm704, %v711, %v712
        %v714 = vrot.slane %v616, 2
        %v715 = vrot.slane %v625, 2
        %v716 = vsel %vm704, %v714, %v715
        %v717 = vrot.slane %v617, 2
        %v718 = vrot.slane %v626, 2
        %v719 = vsel %vm704, %v717, %v718
        %v720 = vrot.slane %v618, 2
        %v721 = vrot.slane %v627, 2
        %v722 = vsel %vm704, %v720, %v721
        %v723 = vrot.slane %v619, 2
        %v724 = vrot.slane %v628, 2
        %v725 = vsel %vm704, %v723, %v724
        %v726 = vrot.slane %v620, 2
        %v727 = vrot.slane %v629, 2
        %v728 = vsel %vm704, %v726, %v727
        %v729 = vrot.slane %v621, 2
        %v730 = vrot.slane %v630, 2
        %v731 = vsel %vm704, %v729, %v730
        %732 = vrot.lane.b32.xlu0 %v707, 64
        %v733 = vpop.permute.xlu0 %732
        %734 = vrot.lane.b32.xlu0 %v710, 64
        %v735 = vpop.permute.xlu0 %734
        %736 = vrot.lane.b32.xlu0 %v713, 64
        %v737 = vpop.permute.xlu0 %736
        %738 = vrot.lane.b32.xlu0 %v716, 64
        %v739 = vpop.permute.xlu0 %738
        %740 = vrot.lane.b32.xlu0 %v719, 64
        %v741 = vpop.permute.xlu0 %740
        %742 = vrot.lane.b32.xlu0 %v722, 64
        %v743 = vpop.permute.xlu0 %742
        %744 = vrot.lane.b32.xlu0 %v725, 64
        %v745 = vpop.permute.xlu0 %744
        %746 = vrot.lane.b32.xlu0 %v728, 64
        %v747 = vpop.permute.xlu0 %746
        %748 = vrot.lane.b32.xlu0 %v731, 64
        %v749 = vpop.permute.xlu0 %748
        %v759 = vsel %vm286, %v613, %v678
        %v760 = vsel %vm286, %v614, %v680
        %v761 = vsel %vm286, %v615, %v682
        %v762 = vsel %vm286, %v616, %v684
        %v763 = vsel %vm286, %v617, %v686
        %v764 = vsel %vm286, %v618, %v688
        %v765 = vsel %vm286, %v619, %v690
        %v766 = vsel %vm286, %v620, %v692
        %v767 = vsel %vm286, %v621, %v694
        %vm768 = vcmask 523264
        %v769 = vsel %vm768, %v759, %v733
        %v770 = vsel %vm768, %v760, %v735
        %v771 = vsel %vm768, %v761, %v737
        %v772 = vsel %vm768, %v762, %v739
        %v773 = vsel %vm768, %v763, %v741
        %v774 = vsel %vm768, %v764, %v743
        %v775 = vsel %vm768, %v765, %v745
        %v776 = vsel %vm768, %v766, %v747
        %v777 = vsel %vm768, %v767, %v749
        %786 = vrot.lane.b32.xlu0 %v770, 96
        %v787 = vpop.permute.xlu0 %786
        %788 = vrot.lane.b32.xlu0 %v771, 96
        %v789 = vpop.permute.xlu0 %788
        %790 = vrot.lane.b32.xlu0 %v772, 96
        %v791 = vpop.permute.xlu0 %790
        %792 = vrot.lane.b32.xlu0 %v773, 96
        %v793 = vpop.permute.xlu0 %792
        %794 = vrot.lane.b32.xlu0 %v774, 96
        %v795 = vpop.permute.xlu0 %794
        %796 = vrot.lane.b32.xlu0 %v775, 96
        %v797 = vpop.permute.xlu0 %796
        %798 = vrot.lane.b32.xlu0 %v776, 96
        %v799 = vpop.permute.xlu0 %798
        %800 = vrot.lane.b32.xlu0 %v777, 96
        %v801 = vpop.permute.xlu0 %800
        %811 = vrot.lane.b32.xlu0 %v771, 64
        %v812 = vpop.permute.xlu0 %811
        %813 = vrot.lane.b32.xlu0 %v772, 64
        %v814 = vpop.permute.xlu0 %813
        %815 = vrot.lane.b32.xlu0 %v773, 64
        %v816 = vpop.permute.xlu0 %815
        %817 = vrot.lane.b32.xlu0 %v774, 64
        %v818 = vpop.permute.xlu0 %817
        %819 = vrot.lane.b32.xlu0 %v775, 64
        %v820 = vpop.permute.xlu0 %819
        %821 = vrot.lane.b32.xlu0 %v776, 64
        %v822 = vpop.permute.xlu0 %821
        %823 = vrot.lane.b32.xlu0 %v777, 64
        %v824 = vpop.permute.xlu0 %823
        %825 = vrot.lane.b32.xlu0 %v769, 64
        %v826 = vpop.permute.xlu0 %825
        %vm835 = vcmask 785408
        %v836 = vsel %vm835, %v769, %v787
        %v837 = vsel %vm835, %v770, %v789
        %v838 = vsel %vm835, %v771, %v791
        %v839 = vsel %vm835, %v772, %v793
        %v840 = vsel %vm835, %v773, %v795
        %v841 = vsel %vm835, %v774, %v797
        %v842 = vsel %vm835, %v775, %v799
        %v843 = vsel %vm835, %v776, %v801
        %v844 = vsel %vm768, %v787, %v812
        %v845 = vsel %vm768, %v789, %v814
        %v846 = vsel %vm768, %v791, %v816
        %v847 = vsel %vm768, %v793, %v818
        %v848 = vsel %vm768, %v795, %v820
        %v849 = vsel %vm768, %v797, %v822
        %v850 = vsel %vm768, %v799, %v824
        %v851 = vsel %vm768, %v801, %v826
        %p852 = scmp.lt.s32.totalorder %s25, 0
        %s853 = ssub.s32 0, %s25
        %s854 = scalar_select %p852, %s853, %s25
        %s855 = sdiv.u32.pop %s854, 3
        %s856 = srem.u32.pop %s854, 3
        %s857 = ssub.s32 0, %s856
        %s858 = scalar_select %p852, %s857, %s856
        %p859 = scmp.eq.s32.totalorder %s858, 0
        %p860 = scmp.eq.s32.totalorder %s25, 0
        %p861 = por %p859, %p860
        // Predicated region
        $region45: #{tpu_custom_call.1} parent=43 // pred_check
          %p862 = pneg %p861
        $region46: #{tpu_custom_call.1} parent=43 // pred_check_branch
          %864 = sbr.rel (%p862) target = $region48
        $region47: #{tpu_custom_call.1} parent=43 // pred_region
          %865 = vst [vmem:[#allocation2] sm:$0xff] %v836
          %866 = vst [vmem:[#allocation2 + $0x8] sm:$0xff] %v844
          %867 = vst.msk [vmem:[#allocation2 + $0x10] sm:$0xff] %vm286, %v812
          %868 = vst [vmem:[#allocation2 + $0x18] sm:$0xff] %v837
          %869 = vst [vmem:[#allocation2 + $0x20] sm:$0xff] %v845
          %870 = vst.msk [vmem:[#allocation2 + $0x28] sm:$0xff] %vm286, %v814
          %871 = vst [vmem:[#allocation2 + $0x30] sm:$0xff] %v838
          %872 = vst [vmem:[#allocation2 + $0x38] sm:$0xff] %v846
          %873 = vst.msk [vmem:[#allocation2 + $0x40] sm:$0xff] %vm286, %v816
          %874 = vst [vmem:[#allocation2 + $0x48] sm:$0xff] %v839
          %875 = vst [vmem:[#allocation2 + $0x50] sm:$0xff] %v847
          %876 = vst.msk [vmem:[#allocation2 + $0x58] sm:$0xff] %vm286, %v818
          %877 = vst [vmem:[#allocation2 + $0x60] sm:$0xff] %v840
          %878 = vst [vmem:[#allocation2 + $0x68] sm:$0xff] %v848
          %879 = vst.msk [vmem:[#allocation2 + $0x70] sm:$0xff] %vm286, %v820
          %880 = vst [vmem:[#allocation2 + $0x78] sm:$0xff] %v841
          %881 = vst [vmem:[#allocation2 + $0x80] sm:$0xff] %v849
          %882 = vst.msk [vmem:[#allocation2 + $0x88] sm:$0xff] %vm286, %v822
          %883 = vst [vmem:[#allocation2 + $0x90] sm:$0xff] %v842
          %884 = vst [vmem:[#allocation2 + $0x98] sm:$0xff] %v850
          %885 = vst.msk [vmem:[#allocation2 + $0xa0] sm:$0xff] %vm286, %v824
          %886 = vst [vmem:[#allocation2 + $0xa8] sm:$0xff] %v843
          %887 = vst [vmem:[#allocation2 + $0xb0] sm:$0xff] %v851
          %888 = vst.msk [vmem:[#allocation2 + $0xb8] sm:$0xff] %vm286, %v826
        $region48: #{tpu_custom_call.1} parent=43 // pred_fallthru
          _
        %p889 = scmp.eq.s32.totalorder %s858, 1
        %p890 = por %p889, %p860
        // Predicated region
        $region49: #{tpu_custom_call.1} parent=43 // pred_check
          %p891 = pneg %p890
        $region50: #{tpu_custom_call.1} parent=43 // pred_check_branch
          %893 = sbr.rel (%p891) target = $region52
        $region51: #{tpu_custom_call.1} parent=43 // pred_region
          %s894 = scalar_lea.vmem [#allocation2], 192
          %895 = vst [vmem:[%s894] sm:$0xff] %v836
          %896 = vst [vmem:[%s894 + $0x8] sm:$0xff] %v844
          %897 = vst.msk [vmem:[%s894 + $0x10] sm:$0xff] %vm286, %v812
          %898 = vst [vmem:[%s894 + $0x18] sm:$0xff] %v837
          %899 = vst [vmem:[%s894 + $0x20] sm:$0xff] %v845
          %900 = vst.msk [vmem:[%s894 + $0x28] sm:$0xff] %vm286, %v814
          %901 = vst [vmem:[%s894 + $0x30] sm:$0xff] %v838
          %902 = vst [vmem:[%s894 + $0x38] sm:$0xff] %v846
          %903 = vst.msk [vmem:[%s894 + $0x40] sm:$0xff] %vm286, %v816
          %904 = vst [vmem:[%s894 + $0x48] sm:$0xff] %v839
          %905 = vst [vmem:[%s894 + $0x50] sm:$0xff] %v847
          %906 = vst.msk [vmem:[%s894 + $0x58] sm:$0xff] %vm286, %v818
          %907 = vst [vmem:[%s894 + $0x60] sm:$0xff] %v840
          %908 = vst [vmem:[%s894 + $0x68] sm:$0xff] %v848
          %909 = vst.msk [vmem:[%s894 + $0x70] sm:$0xff] %vm286, %v820
          %910 = vst [vmem:[%s894 + $0x78] sm:$0xff] %v841
          %911 = vst [vmem:[%s894 + $0x80] sm:$0xff] %v849
          %912 = vst.msk [vmem:[%s894 + $0x88] sm:$0xff] %vm286, %v822
          %913 = vst [vmem:[%s894 + $0x90] sm:$0xff] %v842
          %914 = vst [vmem:[%s894 + $0x98] sm:$0xff] %v850
          %915 = vst.msk [vmem:[%s894 + $0xa0] sm:$0xff] %vm286, %v824
          %916 = vst [vmem:[%s894 + $0xa8] sm:$0xff] %v843
          %917 = vst [vmem:[%s894 + $0xb0] sm:$0xff] %v851
          %918 = vst.msk [vmem:[%s894 + $0xb8] sm:$0xff] %vm286, %v826
        $region52: #{tpu_custom_call.1} parent=43 // pred_fallthru
          _
        %p919 = scmp.eq.s32.totalorder %s858, 2
        %p920 = por %p919, %p860
        // Predicated region
        $region53: #{tpu_custom_call.1} parent=43 // pred_check
          %p921 = pneg %p920
        $region54: #{tpu_custom_call.1} parent=43 // pred_check_branch
          %923 = sbr.rel (%p921) target = $region56
        $region55: #{tpu_custom_call.1} parent=43 // pred_region
          %s924 = scalar_lea.vmem [#allocation2], 384
          %925 = vst [vmem:[%s924] sm:$0xff] %v836
          %926 = vst [vmem:[%s924 + $0x8] sm:$0xff] %v844
          %927 = vst.msk [vmem:[%s924 + $0x10] sm:$0xff] %vm286, %v812
          %928 = vst [vmem:[%s924 + $0x18] sm:$0xff] %v837
          %929 = vst [vmem:[%s924 + $0x20] sm:$0xff] %v845
          %930 = vst.msk [vmem:[%s924 + $0x28] sm:$0xff] %vm286, %v814
          %931 = vst [vmem:[%s924 + $0x30] sm:$0xff] %v838
          %932 = vst [vmem:[%s924 + $0x38] sm:$0xff] %v846
          %933 = vst.msk [vmem:[%s924 + $0x40] sm:$0xff] %vm286, %v816
          %934 = vst [vmem:[%s924 + $0x48] sm:$0xff] %v839
          %935 = vst [vmem:[%s924 + $0x50] sm:$0xff] %v847
          %936 = vst.msk [vmem:[%s924 + $0x58] sm:$0xff] %vm286, %v818
          %937 = vst [vmem:[%s924 + $0x60] sm:$0xff] %v840
          %938 = vst [vmem:[%s924 + $0x68] sm:$0xff] %v848
          %939 = vst.msk [vmem:[%s924 + $0x70] sm:$0xff] %vm286, %v820
          %940 = vst [vmem:[%s924 + $0x78] sm:$0xff] %v841
          %941 = vst [vmem:[%s924 + $0x80] sm:$0xff] %v849
          %942 = vst.msk [vmem:[%s924 + $0x88] sm:$0xff] %vm286, %v822
          %943 = vst [vmem:[%s924 + $0x90] sm:$0xff] %v842
          %944 = vst [vmem:[%s924 + $0x98] sm:$0xff] %v850
          %945 = vst.msk [vmem:[%s924 + $0xa0] sm:$0xff] %vm286, %v824
          %946 = vst [vmem:[%s924 + $0xa8] sm:$0xff] %v843
          %947 = vst [vmem:[%s924 + $0xb0] sm:$0xff] %v851
          %948 = vst.msk [vmem:[%s924 + $0xb8] sm:$0xff] %vm286, %v826
        $region56: #{tpu_custom_call.1} parent=43 // pred_fallthru
          _
        %s949 = sadd.s32 %s25, 1
        %p950 = scmp.lt.s32.totalorder %s949, 0
        %s951 = ssub.s32 0, %s949
        %s952 = scalar_select %p950, %s951, %s949
        %s953 = sdiv.u32.pop %s952, 3
        %s954 = srem.u32.pop %s952, 3
        %s955 = ssub.s32 0, %s954
        %s956 = scalar_select %p950, %s955, %s954
        %s957 = sadd.s32 %s25, 2
        %p958 = scmp.lt.s32.totalorder %s957, 0
        %s959 = ssub.s32 0, %s957
        %s960 = scalar_select %p958, %s959, %s957
        %s961 = sdiv.u32.pop %s960, 3
        %s962 = srem.u32.pop %s960, 3
        %s963 = ssub.s32 0, %s962
        %s964 = scalar_select %p958, %s963, %s962
        %s965 = smul.u32 %s956, 24
        %s966 = smul.addr %s965, 8
        %s967 = scalar_lea.vmem [#allocation2], %s966
        %v968 = vld [vmem:[%s967] sm:$0xff]
        %v969 = vld [vmem:[%s967 + $0x8] sm:$0xff]
        %v970 = vld [vmem:[%s967 + $0x10] sm:$0xff]
        %v971 = vld [vmem:[%s967 + $0x18] sm:$0xff]
        %v972 = vld [vmem:[%s967 + $0x20] sm:$0xff]
        %v973 = vld [vmem:[%s967 + $0x28] sm:$0xff]
        %v974 = vld [vmem:[%s967 + $0x30] sm:$0xff]
        %v975 = vld [vmem:[%s967 + $0x38] sm:$0xff]
        %v976 = vld [vmem:[%s967 + $0x40] sm:$0xff]
        %v977 = vld [vmem:[%s967 + $0x48] sm:$0xff]
        %v978 = vld [vmem:[%s967 + $0x50] sm:$0xff]
        %v979 = vld [vmem:[%s967 + $0x58] sm:$0xff]
        %v980 = vld [vmem:[%s967 + $0x60] sm:$0xff]
        %v981 = vld [vmem:[%s967 + $0x68] sm:$0xff]
        %v982 = vld [vmem:[%s967 + $0x70] sm:$0xff]
        %v983 = vld [vmem:[%s967 + $0x78] sm:$0xff]
        %v984 = vld [vmem:[%s967 + $0x80] sm:$0xff]
        %v985 = vld [vmem:[%s967 + $0x88] sm:$0xff]
        %v986 = vld [vmem:[%s967 + $0x90] sm:$0xff]
        %v987 = vld [vmem:[%s967 + $0x98] sm:$0xff]
        %v988 = vld [vmem:[%s967 + $0xa0] sm:$0xff]
        %v989 = vld [vmem:[%s967 + $0xa8] sm:$0xff]
        %v990 = vld [vmem:[%s967 + $0xb0] sm:$0xff]
        %v991 = vld [vmem:[%s967 + $0xb8] sm:$0xff]
        %v992 = vld [vmem:[%s4] sm:$0xff]
        %v993 = vld [vmem:[%s4 + $0x8] sm:$0xff]
        %v994 = vld [vmem:[%s4 + $0x10] sm:$0xff]
        %v995 = vld [vmem:[%s4 + $0x18] sm:$0xff]
        %v996 = vld [vmem:[%s4 + $0x20] sm:$0xff]
        %v997 = vld [vmem:[%s4 + $0x28] sm:$0xff]
        %v998 = vld [vmem:[%s4 + $0x30] sm:$0xff]
        %v999 = vld [vmem:[%s4 + $0x38] sm:$0xff]
        %v1000 = vld [vmem:[%s4 + $0x40] sm:$0xff]
        %v1001 = vld [vmem:[%s4 + $0x48] sm:$0xff]
        %v1002 = vld [vmem:[%s4 + $0x50] sm:$0xff]
        %v1003 = vld [vmem:[%s4 + $0x58] sm:$0xff]
        %v1004 = vld [vmem:[%s4 + $0x60] sm:$0xff]
        %v1005 = vld [vmem:[%s4 + $0x68] sm:$0xff]
        %v1006 = vld [vmem:[%s4 + $0x70] sm:$0xff]
        %v1007 = vld [vmem:[%s4 + $0x78] sm:$0xff]
        %v1008 = vld [vmem:[%s4 + $0x80] sm:$0xff]
        %v1009 = vld [vmem:[%s4 + $0x88] sm:$0xff]
        %v1010 = vld [vmem:[%s4 + $0x90] sm:$0xff]
        %v1011 = vld [vmem:[%s4 + $0x98] sm:$0xff]
        %v1012 = vld [vmem:[%s4 + $0xa0] sm:$0xff]
        %v1013 = vld [vmem:[%s4 + $0xa8] sm:$0xff]
        %v1014 = vld [vmem:[%s4 + $0xb0] sm:$0xff]
        %v1015 = vld [vmem:[%s4 + $0xb8] sm:$0xff]
        %v1016 = vld [vmem:[%s4 + $0xc0] sm:$0xff]
        %v1017 = vld [vmem:[%s4 + $0xc8] sm:$0xff]
        %v1018 = vld [vmem:[%s4 + $0xd0] sm:$0xff]
        %v1019 = vld [vmem:[%s4 + $0xd8] sm:$0xff]
        %v1020 = vld [vmem:[%s4 + $0xe0] sm:$0xff]
        %v1021 = vld [vmem:[%s4 + $0xe8] sm:$0xff]
        %v1022 = vld [vmem:[%s4 + $0xf0] sm:$0xff]
        %v1023 = vld [vmem:[%s4 + $0xf8] sm:$0xff]
        %v1024 = vld [vmem:[%s4 + $0x100] sm:$0xff]
        %v1025 = vld [vmem:[%s4 + $0x108] sm:$0xff]
        %v1026 = vld [vmem:[%s4 + $0x110] sm:$0xff]
        %v1027 = vld [vmem:[%s4 + $0x118] sm:$0xff]
        %s1028 = smul.u32 %s964, 24
        %s1029 = smul.addr %s1028, 8
        %s1030 = scalar_lea.vmem [#allocation2], %s1029
        %v1031 = vld [vmem:[%s1030] sm:$0xff]
        %v1032 = vld [vmem:[%s1030 + $0x8] sm:$0xff]
        %v1033 = vld [vmem:[%s1030 + $0x10] sm:$0xff]
        %v1034 = vld [vmem:[%s1030 + $0x18] sm:$0xff]
        %v1035 = vld [vmem:[%s1030 + $0x20] sm:$0xff]
        %v1036 = vld [vmem:[%s1030 + $0x28] sm:$0xff]
        %v1037 = vld [vmem:[%s1030 + $0x30] sm:$0xff]
        %v1038 = vld [vmem:[%s1030 + $0x38] sm:$0xff]
        %v1039 = vld [vmem:[%s1030 + $0x40] sm:$0xff]
        %v1040 = vld [vmem:[%s1030 + $0x48] sm:$0xff]
        %v1041 = vld [vmem:[%s1030 + $0x50] sm:$0xff]
        %v1042 = vld [vmem:[%s1030 + $0x58] sm:$0xff]
        %v1043 = vld [vmem:[%s1030 + $0x60] sm:$0xff]
        %v1044 = vld [vmem:[%s1030 + $0x68] sm:$0xff]
        %v1045 = vld [vmem:[%s1030 + $0x70] sm:$0xff]
        %v1046 = vld [vmem:[%s1030 + $0x78] sm:$0xff]
        %v1047 = vld [vmem:[%s1030 + $0x80] sm:$0xff]
        %v1048 = vld [vmem:[%s1030 + $0x88] sm:$0xff]
        %v1049 = vld [vmem:[%s1030 + $0x90] sm:$0xff]
        %v1050 = vld [vmem:[%s1030 + $0x98] sm:$0xff]
        %v1051 = vld [vmem:[%s1030 + $0xa0] sm:$0xff]
        %v1052 = vld [vmem:[%s1030 + $0xa8] sm:$0xff]
        %v1053 = vld [vmem:[%s1030 + $0xb0] sm:$0xff]
        %v1054 = vld [vmem:[%s1030 + $0xb8] sm:$0xff]
        %s1055 = scalar_lea.vmem %s4, 288
        %v1056 = vld [vmem:[%s1055] sm:$0xff]
        %v1057 = vld [vmem:[%s1055 + $0x8] sm:$0xff]
        %v1058 = vld [vmem:[%s1055 + $0x10] sm:$0xff]
        %v1059 = vld [vmem:[%s1055 + $0x18] sm:$0xff]
        %v1060 = vld [vmem:[%s1055 + $0x20] sm:$0xff]
        %v1061 = vld [vmem:[%s1055 + $0x28] sm:$0xff]
        %v1062 = vld [vmem:[%s1055 + $0x30] sm:$0xff]
        %v1063 = vld [vmem:[%s1055 + $0x38] sm:$0xff]
        %v1064 = vld [vmem:[%s1055 + $0x40] sm:$0xff]
        %v1065 = vld [vmem:[%s1055 + $0x48] sm:$0xff]
        %v1066 = vld [vmem:[%s1055 + $0x50] sm:$0xff]
        %v1067 = vld [vmem:[%s1055 + $0x58] sm:$0xff]
        %v1068 = vld [vmem:[%s1055 + $0x60] sm:$0xff]
        %v1069 = vld [vmem:[%s1055 + $0x68] sm:$0xff]
        %v1070 = vld [vmem:[%s1055 + $0x70] sm:$0xff]
        %v1071 = vld [vmem:[%s1055 + $0x78] sm:$0xff]
        %v1072 = vld [vmem:[%s1055 + $0x80] sm:$0xff]
        %v1073 = vld [vmem:[%s1055 + $0x88] sm:$0xff]
        %v1074 = vld [vmem:[%s1055 + $0x90] sm:$0xff]
        %v1075 = vld [vmem:[%s1055 + $0x98] sm:$0xff]
        %v1076 = vld [vmem:[%s1055 + $0xa0] sm:$0xff]
        %v1077 = vld [vmem:[%s1055 + $0xa8] sm:$0xff]
        %v1078 = vld [vmem:[%s1055 + $0xb0] sm:$0xff]
        %v1079 = vld [vmem:[%s1055 + $0xb8] sm:$0xff]
        %v1080 = vld [vmem:[%s1055 + $0xc0] sm:$0xff]
        %v1081 = vld [vmem:[%s1055 + $0xc8] sm:$0xff]
        %v1082 = vld [vmem:[%s1055 + $0xd0] sm:$0xff]
        %v1083 = vld [vmem:[%s1055 + $0xd8] sm:$0xff]
        %v1084 = vld [vmem:[%s1055 + $0xe0] sm:$0xff]
        %v1085 = vld [vmem:[%s1055 + $0xe8] sm:$0xff]
        %v1086 = vld [vmem:[%s1055 + $0xf0] sm:$0xff]
        %v1087 = vld [vmem:[%s1055 + $0xf8] sm:$0xff]
        %v1088 = vld [vmem:[%s1055 + $0x100] sm:$0xff]
        %v1089 = vld [vmem:[%s1055 + $0x108] sm:$0xff]
        %v1090 = vld [vmem:[%s1055 + $0x110] sm:$0xff]
        %v1091 = vld [vmem:[%s1055 + $0x118] sm:$0xff]
        %v1093 = vsel %vm286, %v1033, 0
        %v1096 = vsel %vm286, %v1036, 0
        %v1099 = vsel %vm286, %v1039, 0
        %v1102 = vsel %vm286, %v1042, 0
        %v1105 = vsel %vm286, %v1045, 0
        %v1108 = vsel %vm286, %v1048, 0
        %v1111 = vsel %vm286, %v1051, 0
        %v1114 = vsel %vm286, %v1054, 0
        %1116 = vmatprep.subr.mxu0 0.0
        %1117 = vmatpush1.msra.mxu0 %v1071
        %1118 = vmatprep.subr.mxu0 0.0
        %1119 = vmatpush1.msra.mxu0 %v1070
        %1120 = vmatprep.subr.mxu0 0.0
        %1121 = vmatpush1.msra.mxu0 %v1069
        %1122 = vmatprep.subr.mxu0 0.0
        %1123 = vmatpush1.msra.mxu0 %v1068
        %1124 = vmatprep.subr.mxu0 0.0
        %1125 = vmatpush1.msra.mxu0 %v1067
        %1126 = vmatprep.subr.mxu0 0.0
        %1127 = vmatpush1.msra.mxu0 %v1066
        %1128 = vmatprep.subr.mxu0 0.0
        %1129 = vmatpush1.msra.mxu0 %v1065
        %1130 = vmatprep.subr.mxu0 0.0
        %1131 = vmatpush1.msra.mxu0 %v1064
        %1132 = vmatprep.subr.mxu0 0.0
        %1133 = vmatpush1.msra.mxu0 %v1063
        %1134 = vmatprep.subr.mxu0 0.0
        %1135 = vmatpush1.msra.mxu0 %v1062
        %1136 = vmatprep.subr.mxu0 0.0
        %1137 = vmatpush1.msra.mxu0 %v1061
        %1138 = vmatprep.subr.mxu0 0.0
        %1139 = vmatpush1.msra.mxu0 %v1060
        %1140 = vmatprep.subr.mxu0 0.0
        %1141 = vmatpush1.msra.mxu0 %v1059
        %1142 = vmatprep.subr.mxu0 0.0
        %1143 = vmatpush1.msra.mxu0 %v1058
        %1144 = vmatprep.subr.mxu0 0.0
        %1145 = vmatpush1.msra.mxu0 %v1057
        %1146 = vmatprep.subr.mxu0 0.0
        %1147 = vmatpush1.msra.mxu0 %v1056
        %1148 = vmatprep.subr.mxu0 0.0
        %1149 = vmatpush2.msra.mxu0 %v1087
        %1150 = vmatprep.subr.mxu0 0.0
        %1151 = vmatpush2.msra.mxu0 %v1086
        %1152 = vmatprep.subr.mxu0 0.0
        %1153 = vmatpush2.msra.mxu0 %v1085
        %1154 = vmatprep.subr.mxu0 0.0
        %1155 = vmatpush2.msra.mxu0 %v1084
        %1156 = vmatprep.subr.mxu0 0.0
        %1157 = vmatpush2.msra.mxu0 %v1083
        %1158 = vmatprep.subr.mxu0 0.0
        %1159 = vmatpush2.msra.mxu0 %v1082
        %1160 = vmatprep.subr.mxu0 0.0
        %1161 = vmatpush2.msra.mxu0 %v1081
        %1162 = vmatprep.subr.mxu0 0.0
        %1163 = vmatpush2.msra.mxu0 %v1080
        %1164 = vmatprep.subr.mxu0 0.0
        %1165 = vmatpush2.msra.mxu0 %v1079
        %1166 = vmatprep.subr.mxu0 0.0
        %1167 = vmatpush2.msra.mxu0 %v1078
        %1168 = vmatprep.subr.mxu0 0.0
        %1169 = vmatpush2.msra.mxu0 %v1077
        %1170 = vmatprep.subr.mxu0 0.0
        %1171 = vmatpush2.msra.mxu0 %v1076
        %1172 = vmatprep.subr.mxu0 0.0
        %1173 = vmatpush2.msra.mxu0 %v1075
        %1174 = vmatprep.subr.mxu0 0.0
        %1175 = vmatpush2.msra.mxu0 %v1074
        %1176 = vmatprep.subr.mxu0 0.0
        %1177 = vmatpush2.msra.mxu0 %v1073
        %1178 = vmatprep.subr.mxu0 0.0
        %1179 = vmatpush2.msra.mxu0 %v1072
        %1180 = vmatprep.mubr.f32.mxu0 %v1032
        %1181 = vmatmul.mubr.f32.gmra.mxu0 %v1031
        %v1182 = vpop.f32.mrf.mxu0
        %v1183 = vadd.f32 0.0, %v1182
        %v1184 = vpop.f32.mrf.mxu0
        %1185 = vmatprep.mubr.f32.mxu0 %v1035
        %1186 = vmatmul.mubr.f32.gmra.mxu0 %v1034
        %v1187 = vpop.f32.mrf.mxu0
        %v1188 = vadd.f32 0.0, %v1187
        %v1189 = vpop.f32.mrf.mxu0
        %1190 = vmatprep.mubr.f32.mxu0 %v1038
        %1191 = vmatmul.mubr.f32.gmra.mxu0 %v1037
        %v1192 = vpop.f32.mrf.mxu0
        %v1193 = vadd.f32 0.0, %v1192
        %v1194 = vpop.f32.mrf.mxu0
        %1195 = vmatprep.mubr.f32.mxu0 %v1041
        %1196 = vmatmul.mubr.f32.gmra.mxu0 %v1040
        %v1197 = vpop.f32.mrf.mxu0
        %v1198 = vadd.f32 0.0, %v1197
        %v1199 = vpop.f32.mrf.mxu0
        %1200 = vmatprep.mubr.f32.mxu0 %v1044
        %1201 = vmatmul.mubr.f32.gmra.mxu0 %v1043
        %v1202 = vpop.f32.mrf.mxu0
        %v1203 = vadd.f32 0.0, %v1202
        %v1204 = vpop.f32.mrf.mxu0
        %1205 = vmatprep.mubr.f32.mxu0 %v1047
        %1206 = vmatmul.mubr.f32.gmra.mxu0 %v1046
        %v1207 = vpop.f32.mrf.mxu0
        %v1208 = vadd.f32 0.0, %v1207
        %v1209 = vpop.f32.mrf.mxu0
        %1210 = vmatprep.mubr.f32.mxu0 %v1050
        %1211 = vmatmul.mubr.f32.gmra.mxu0 %v1049
        %v1212 = vpop.f32.mrf.mxu0
        %v1213 = vadd.f32 0.0, %v1212
        %v1214 = vpop.f32.mrf.mxu0
        %1215 = vmatprep.mubr.f32.mxu0 %v1053
        %1216 = vmatmul.mubr.f32.gmra.mxu0 %v1052
        %v1217 = vpop.f32.mrf.mxu0
        %v1218 = vadd.f32 0.0, %v1217
        %v1219 = vpop.f32.mrf.mxu0
        %1220 = vdwg.mxu0
        %1221 = vmatprep.subr.mxu0 0.0
        %1222 = vmatpush1.msra.mxu0 0.0
        %1223 = vmatprep.subr.mxu0 0.0
        %1224 = vmatpush1.msra.mxu0 0.0
        %1225 = vmatprep.subr.mxu0 0.0
        %1226 = vmatpush1.msra.mxu0 0.0
        %1227 = vmatprep.subr.mxu0 0.0
        %1228 = vmatpush1.msra.mxu0 0.0
        %1229 = vmatprep.subr.mxu0 0.0
        %1230 = vmatpush1.msra.mxu0 0.0
        %1231 = vmatprep.subr.mxu0 0.0
        %1232 = vmatpush1.msra.mxu0 0.0
        %1233 = vmatprep.subr.mxu0 0.0
        %1234 = vmatpush1.msra.mxu0 0.0
        %1235 = vmatprep.subr.mxu0 0.0
        %1236 = vmatpush1.msra.mxu0 0.0
        %1237 = vmatprep.subr.mxu0 0.0
        %1238 = vmatpush1.msra.mxu0 0.0
        %1239 = vmatprep.subr.mxu0 0.0
        %1240 = vmatpush1.msra.mxu0 0.0
        %1241 = vmatprep.subr.mxu0 0.0
        %1242 = vmatpush1.msra.mxu0 0.0
        %1243 = vmatprep.subr.mxu0 0.0
        %1244 = vmatpush1.msra.mxu0 0.0
        %1245 = vmatprep.subr.mxu0 0.0
        %1246 = vmatpush1.msra.mxu0 %v1091
        %1247 = vmatprep.subr.mxu0 0.0
        %1248 = vmatpush1.msra.mxu0 %v1090
        %1249 = vmatprep.subr.mxu0 0.0
        %1250 = vmatpush1.msra.mxu0 %v1089
        %1251 = vmatprep.subr.mxu0 0.0
        %1252 = vmatpush1.msra.mxu0 %v1088
        %1253 = vmatprep.subr.mxu0 0.0
        %1254 = vmatpush2.msra.mxu0 0.0
        %1255 = vmatprep.subr.mxu0 0.0
        %1256 = vmatpush2.msra.mxu0 0.0
        %1257 = vmatprep.subr.mxu0 0.0
        %1258 = vmatpush2.msra.mxu0 0.0
        %1259 = vmatprep.subr.mxu0 0.0
        %1260 = vmatpush2.msra.mxu0 0.0
        %1261 = vmatprep.subr.mxu0 0.0
        %1262 = vmatpush2.msra.mxu0 0.0
        %1263 = vmatprep.subr.mxu0 0.0
        %1264 = vmatpush2.msra.mxu0 0.0
        %1265 = vmatprep.subr.mxu0 0.0
        %1266 = vmatpush2.msra.mxu0 0.0
        %1267 = vmatprep.subr.mxu0 0.0
        %1268 = vmatpush2.msra.mxu0 0.0
        %1269 = vmatprep.subr.mxu0 0.0
        %1270 = vmatpush2.msra.mxu0 0.0
        %1271 = vmatprep.subr.mxu0 0.0
        %1272 = vmatpush2.msra.mxu0 0.0
        %1273 = vmatprep.subr.mxu0 0.0
        %1274 = vmatpush2.msra.mxu0 0.0
        %1275 = vmatprep.subr.mxu0 0.0
        %1276 = vmatpush2.msra.mxu0 0.0
        %1277 = vmatprep.subr.mxu0 0.0
        %1278 = vmatpush2.msra.mxu0 0.0
        %1279 = vmatprep.subr.mxu0 0.0
        %1280 = vmatpush2.msra.mxu0 0.0
        %1281 = vmatprep.subr.mxu0 0.0
        %1282 = vmatpush2.msra.mxu0 0.0
        %1283 = vmatprep.subr.mxu0 0.0
        %1284 = vmatpush2.msra.mxu0 0.0
        %1285 = vmatprep.mubr.f32.mxu0 0.0
        %1286 = vmatmul.mubr.f32.gmra.mxu0 %v1093
        %v1287 = vpop.f32.mrf.mxu0
        %v1288 = vadd.f32 %v1183, %v1287
        %v1289 = vpop.f32.mrf.mxu0
        %1290 = vmatprep.mubr.f32.mxu0 0.0
        %1291 = vmatmul.mubr.f32.gmra.mxu0 %v1096
        %v1292 = vpop.f32.mrf.mxu0
        %v1293 = vadd.f32 %v1188, %v1292
        %v1294 = vpop.f32.mrf.mxu0
        %1295 = vmatprep.mubr.f32.mxu0 0.0
        %1296 = vmatmul.mubr.f32.gmra.mxu0 %v1099
        %v1297 = vpop.f32.mrf.mxu0
        %v1298 = vadd.f32 %v1193, %v1297
        %v1299 = vpop.f32.mrf.mxu0
        %1300 = vmatprep.mubr.f32.mxu0 0.0
        %1301 = vmatmul.mubr.f32.gmra.mxu0 %v1102
        %v1302 = vpop.f32.mrf.mxu0
        %v1303 = vadd.f32 %v1198, %v1302
        %v1304 = vpop.f32.mrf.mxu0
        %1305 = vmatprep.mubr.f32.mxu0 0.0
        %1306 = vmatmul.mubr.f32.gmra.mxu0 %v1105
        %v1307 = vpop.f32.mrf.mxu0
        %v1308 = vadd.f32 %v1203, %v1307
        %v1309 = vpop.f32.mrf.mxu0
        %1310 = vmatprep.mubr.f32.mxu0 0.0
        %1311 = vmatmul.mubr.f32.gmra.mxu0 %v1108
        %v1312 = vpop.f32.mrf.mxu0
        %v1313 = vadd.f32 %v1208, %v1312
        %v1314 = vpop.f32.mrf.mxu0
        %1315 = vmatprep.mubr.f32.mxu0 0.0
        %1316 = vmatmul.mubr.f32.gmra.mxu0 %v1111
        %v1317 = vpop.f32.mrf.mxu0
        %v1318 = vadd.f32 %v1213, %v1317
        %v1319 = vpop.f32.mrf.mxu0
        %1320 = vmatprep.mubr.f32.mxu0 0.0
        %1321 = vmatmul.mubr.f32.gmra.mxu0 %v1114
        %v1322 = vpop.f32.mrf.mxu0
        %v1323 = vadd.f32 %v1218, %v1322
        %v1324 = vpop.f32.mrf.mxu0
        %1325 = vdwg.mxu0
        %v1327 = vsel %vm286, %v970, 0
        %v1330 = vsel %vm286, %v973, 0
        %v1333 = vsel %vm286, %v976, 0
        %v1336 = vsel %vm286, %v979, 0
        %v1339 = vsel %vm286, %v982, 0
        %v1342 = vsel %vm286, %v985, 0
        %v1345 = vsel %vm286, %v988, 0
        %v1348 = vsel %vm286, %v991, 0
        %1350 = vmatprep.subr.mxu0 0.0
        %1351 = vmatpush1.msra.mxu0 %v1007
        %1352 = vmatprep.subr.mxu0 0.0
        %1353 = vmatpush1.msra.mxu0 %v1006
        %1354 = vmatprep.subr.mxu0 0.0
        %1355 = vmatpush1.msra.mxu0 %v1005
        %1356 = vmatprep.subr.mxu0 0.0
        %1357 = vmatpush1.msra.mxu0 %v1004
        %1358 = vmatprep.subr.mxu0 0.0
        %1359 = vmatpush1.msra.mxu0 %v1003
        %1360 = vmatprep.subr.mxu0 0.0
        %1361 = vmatpush1.msra.mxu0 %v1002
        %1362 = vmatprep.subr.mxu0 0.0
        %1363 = vmatpush1.msra.mxu0 %v1001
        %1364 = vmatprep.subr.mxu0 0.0
        %1365 = vmatpush1.msra.mxu0 %v1000
        %1366 = vmatprep.subr.mxu0 0.0
        %1367 = vmatpush1.msra.mxu0 %v999
        %1368 = vmatprep.subr.mxu0 0.0
        %1369 = vmatpush1.msra.mxu0 %v998
        %1370 = vmatprep.subr.mxu0 0.0
        %1371 = vmatpush1.msra.mxu0 %v997
        %1372 = vmatprep.subr.mxu0 0.0
        %1373 = vmatpush1.msra.mxu0 %v996
        %1374 = vmatprep.subr.mxu0 0.0
        %1375 = vmatpush1.msra.mxu0 %v995
        %1376 = vmatprep.subr.mxu0 0.0
        %1377 = vmatpush1.msra.mxu0 %v994
        %1378 = vmatprep.subr.mxu0 0.0
        %1379 = vmatpush1.msra.mxu0 %v993
        %1380 = vmatprep.subr.mxu0 0.0
        %1381 = vmatpush1.msra.mxu0 %v992
        %1382 = vmatprep.subr.mxu0 0.0
        %1383 = vmatpush2.msra.mxu0 %v1023
        %1384 = vmatprep.subr.mxu0 0.0
        %1385 = vmatpush2.msra.mxu0 %v1022
        %1386 = vmatprep.subr.mxu0 0.0
        %1387 = vmatpush2.msra.mxu0 %v1021
        %1388 = vmatprep.subr.mxu0 0.0
        %1389 = vmatpush2.msra.mxu0 %v1020
        %1390 = vmatprep.subr.mxu0 0.0
        %1391 = vmatpush2.msra.mxu0 %v1019
        %1392 = vmatprep.subr.mxu0 0.0
        %1393 = vmatpush2.msra.mxu0 %v1018
        %1394 = vmatprep.subr.mxu0 0.0
        %1395 = vmatpush2.msra.mxu0 %v1017
        %1396 = vmatprep.subr.mxu0 0.0
        %1397 = vmatpush2.msra.mxu0 %v1016
        %1398 = vmatprep.subr.mxu0 0.0
        %1399 = vmatpush2.msra.mxu0 %v1015
        %1400 = vmatprep.subr.mxu0 0.0
        %1401 = vmatpush2.msra.mxu0 %v1014
        %1402 = vmatprep.subr.mxu0 0.0
        %1403 = vmatpush2.msra.mxu0 %v1013
        %1404 = vmatprep.subr.mxu0 0.0
        %1405 = vmatpush2.msra.mxu0 %v1012
        %1406 = vmatprep.subr.mxu0 0.0
        %1407 = vmatpush2.msra.mxu0 %v1011
        %1408 = vmatprep.subr.mxu0 0.0
        %1409 = vmatpush2.msra.mxu0 %v1010
        %1410 = vmatprep.subr.mxu0 0.0
        %1411 = vmatpush2.msra.mxu0 %v1009
        %1412 = vmatprep.subr.mxu0 0.0
        %1413 = vmatpush2.msra.mxu0 %v1008
        %1414 = vmatprep.mubr.f32.mxu0 %v969
        %1415 = vmatmul.mubr.f32.gmra.mxu0 %v968
        %v1416 = vpop.f32.mrf.mxu0
        %v1417 = vadd.f32 %v1288, %v1416
        %v1418 = vpop.f32.mrf.mxu0
        %1419 = vmatprep.mubr.f32.mxu0 %v972
        %1420 = vmatmul.mubr.f32.gmra.mxu0 %v971
        %v1421 = vpop.f32.mrf.mxu0
        %v1422 = vadd.f32 %v1293, %v1421
        %v1423 = vpop.f32.mrf.mxu0
        %1424 = vmatprep.mubr.f32.mxu0 %v975
        %1425 = vmatmul.mubr.f32.gmra.mxu0 %v974
        %v1426 = vpop.f32.mrf.mxu0
        %v1427 = vadd.f32 %v1298, %v1426
        %v1428 = vpop.f32.mrf.mxu0
        %1429 = vmatprep.mubr.f32.mxu0 %v978
        %1430 = vmatmul.mubr.f32.gmra.mxu0 %v977
        %v1431 = vpop.f32.mrf.mxu0
        %v1432 = vadd.f32 %v1303, %v1431
        %v1433 = vpop.f32.mrf.mxu0
        %1434 = vmatprep.mubr.f32.mxu0 %v981
        %1435 = vmatmul.mubr.f32.gmra.mxu0 %v980
        %v1436 = vpop.f32.mrf.mxu0
        %v1437 = vadd.f32 %v1308, %v1436
        %v1438 = vpop.f32.mrf.mxu0
        %1439 = vmatprep.mubr.f32.mxu0 %v984
        %1440 = vmatmul.mubr.f32.gmra.mxu0 %v983
        %v1441 = vpop.f32.mrf.mxu0
        %v1442 = vadd.f32 %v1313, %v1441
        %v1443 = vpop.f32.mrf.mxu0
        %1444 = vmatprep.mubr.f32.mxu0 %v987
        %1445 = vmatmul.mubr.f32.gmra.mxu0 %v986
        %v1446 = vpop.f32.mrf.mxu0
        %v1447 = vadd.f32 %v1318, %v1446
        %v1448 = vpop.f32.mrf.mxu0
        %1449 = vmatprep.mubr.f32.mxu0 %v990
        %1450 = vmatmul.mubr.f32.gmra.mxu0 %v989
        %v1451 = vpop.f32.mrf.mxu0
        %v1452 = vadd.f32 %v1323, %v1451
        %v1453 = vpop.f32.mrf.mxu0
        %1454 = vdwg.mxu0
        %1455 = vmatprep.subr.mxu0 0.0
        %1456 = vmatpush1.msra.mxu0 0.0
        %1457 = vmatprep.subr.mxu0 0.0
        %1458 = vmatpush1.msra.mxu0 0.0
        %1459 = vmatprep.subr.mxu0 0.0
        %1460 = vmatpush1.msra.mxu0 0.0
        %1461 = vmatprep.subr.mxu0 0.0
        %1462 = vmatpush1.msra.mxu0 0.0
        %1463 = vmatprep.subr.mxu0 0.0
        %1464 = vmatpush1.msra.mxu0 0.0
        %1465 = vmatprep.subr.mxu0 0.0
        %1466 = vmatpush1.msra.mxu0 0.0
        %1467 = vmatprep.subr.mxu0 0.0
        %1468 = vmatpush1.msra.mxu0 0.0
        %1469 = vmatprep.subr.mxu0 0.0
        %1470 = vmatpush1.msra.mxu0 0.0
        %1471 = vmatprep.subr.mxu0 0.0
        %1472 = vmatpush1.msra.mxu0 0.0
        %1473 = vmatprep.subr.mxu0 0.0
        %1474 = vmatpush1.msra.mxu0 0.0
        %1475 = vmatprep.subr.mxu0 0.0
        %1476 = vmatpush1.msra.mxu0 0.0
        %1477 = vmatprep.subr.mxu0 0.0
        %1478 = vmatpush1.msra.mxu0 0.0
        %1479 = vmatprep.subr.mxu0 0.0
        %1480 = vmatpush1.msra.mxu0 %v1027
        %1481 = vmatprep.subr.mxu0 0.0
        %1482 = vmatpush1.msra.mxu0 %v1026
        %1483 = vmatprep.subr.mxu0 0.0
        %1484 = vmatpush1.msra.mxu0 %v1025
        %1485 = vmatprep.subr.mxu0 0.0
        %1486 = vmatpush1.msra.mxu0 %v1024
        %1487 = vmatprep.subr.mxu0 0.0
        %1488 = vmatpush2.msra.mxu0 0.0
        %1489 = vmatprep.subr.mxu0 0.0
        %1490 = vmatpush2.msra.mxu0 0.0
        %1491 = vmatprep.subr.mxu0 0.0
        %1492 = vmatpush2.msra.mxu0 0.0
        %1493 = vmatprep.subr.mxu0 0.0
        %1494 = vmatpush2.msra.mxu0 0.0
        %1495 = vmatprep.subr.mxu0 0.0
        %1496 = vmatpush2.msra.mxu0 0.0
        %1497 = vmatprep.subr.mxu0 0.0
        %1498 = vmatpush2.msra.mxu0 0.0
        %1499 = vmatprep.subr.mxu0 0.0
        %1500 = vmatpush2.msra.mxu0 0.0
        %1501 = vmatprep.subr.mxu0 0.0
        %1502 = vmatpush2.msra.mxu0 0.0
        %1503 = vmatprep.subr.mxu0 0.0
        %1504 = vmatpush2.msra.mxu0 0.0
        %1505 = vmatprep.subr.mxu0 0.0
        %1506 = vmatpush2.msra.mxu0 0.0
        %1507 = vmatprep.subr.mxu0 0.0
        %1508 = vmatpush2.msra.mxu0 0.0
        %1509 = vmatprep.subr.mxu0 0.0
        %1510 = vmatpush2.msra.mxu0 0.0
        %1511 = vmatprep.subr.mxu0 0.0
        %1512 = vmatpush2.msra.mxu0 0.0
        %1513 = vmatprep.subr.mxu0 0.0
        %1514 = vmatpush2.msra.mxu0 0.0
        %1515 = vmatprep.subr.mxu0 0.0
        %1516 = vmatpush2.msra.mxu0 0.0
        %1517 = vmatprep.subr.mxu0 0.0
        %1518 = vmatpush2.msra.mxu0 0.0
        %1519 = vmatprep.mubr.f32.mxu0 0.0
        %1520 = vmatmul.mubr.f32.gmra.mxu0 %v1327
        %v1521 = vpop.f32.mrf.mxu0
        %v1522 = vadd.f32 %v1417, %v1521
        %v1523 = vpop.f32.mrf.mxu0
        %1524 = vmatprep.mubr.f32.mxu0 0.0
        %1525 = vmatmul.mubr.f32.gmra.mxu0 %v1330
        %v1526 = vpop.f32.mrf.mxu0
        %v1527 = vadd.f32 %v1422, %v1526
        %v1528 = vpop.f32.mrf.mxu0
        %1529 = vmatprep.mubr.f32.mxu0 0.0
        %1530 = vmatmul.mubr.f32.gmra.mxu0 %v1333
        %v1531 = vpop.f32.mrf.mxu0
        %v1532 = vadd.f32 %v1427, %v1531
        %v1533 = vpop.f32.mrf.mxu0
        %1534 = vmatprep.mubr.f32.mxu0 0.0
        %1535 = vmatmul.mubr.f32.gmra.mxu0 %v1336
        %v1536 = vpop.f32.mrf.mxu0
        %v1537 = vadd.f32 %v1432, %v1536
        %v1538 = vpop.f32.mrf.mxu0
        %1539 = vmatprep.mubr.f32.mxu0 0.0
        %1540 = vmatmul.mubr.f32.gmra.mxu0 %v1339
        %v1541 = vpop.f32.mrf.mxu0
        %v1542 = vadd.f32 %v1437, %v1541
        %v1543 = vpop.f32.mrf.mxu0
        %1544 = vmatprep.mubr.f32.mxu0 0.0
        %1545 = vmatmul.mubr.f32.gmra.mxu0 %v1342
        %v1546 = vpop.f32.mrf.mxu0
        %v1547 = vadd.f32 %v1442, %v1546
        %v1548 = vpop.f32.mrf.mxu0
        %1549 = vmatprep.mubr.f32.mxu0 0.0
        %1550 = vmatmul.mubr.f32.gmra.mxu0 %v1345
        %v1551 = vpop.f32.mrf.mxu0
        %v1552 = vadd.f32 %v1447, %v1551
        %v1553 = vpop.f32.mrf.mxu0
        %1554 = vmatprep.mubr.f32.mxu0 0.0
        %1555 = vmatmul.mubr.f32.gmra.mxu0 %v1348
        %v1556 = vpop.f32.mrf.mxu0
        %v1557 = vadd.f32 %v1452, %v1556
        %v1558 = vpop.f32.mrf.mxu0
        %1559 = vdwg.mxu0
        %s1560 = scalar_lea.vmem %s4, 576
        %v1561 = vld [vmem:[%s1560] sm:$0xff]
        %v1562 = vld [vmem:[%s1560 + $0x8] sm:$0xff]
        %v1563 = vld [vmem:[%s1560 + $0x10] sm:$0xff]
        %v1564 = vld [vmem:[%s1560 + $0x18] sm:$0xff]
        %v1565 = vld [vmem:[%s1560 + $0x20] sm:$0xff]
        %v1566 = vld [vmem:[%s1560 + $0x28] sm:$0xff]
        %v1567 = vld [vmem:[%s1560 + $0x30] sm:$0xff]
        %v1568 = vld [vmem:[%s1560 + $0x38] sm:$0xff]
        %v1569 = vld [vmem:[%s1560 + $0x40] sm:$0xff]
        %v1570 = vld [vmem:[%s1560 + $0x48] sm:$0xff]
        %v1571 = vld [vmem:[%s1560 + $0x50] sm:$0xff]
        %v1572 = vld [vmem:[%s1560 + $0x58] sm:$0xff]
        %v1573 = vld [vmem:[%s1560 + $0x60] sm:$0xff]
        %v1574 = vld [vmem:[%s1560 + $0x68] sm:$0xff]
        %v1575 = vld [vmem:[%s1560 + $0x70] sm:$0xff]
        %v1576 = vld [vmem:[%s1560 + $0x78] sm:$0xff]
        %v1577 = vld [vmem:[%s1560 + $0x80] sm:$0xff]
        %v1578 = vld [vmem:[%s1560 + $0x88] sm:$0xff]
        %v1579 = vld [vmem:[%s1560 + $0x90] sm:$0xff]
        %v1580 = vld [vmem:[%s1560 + $0x98] sm:$0xff]
        %v1581 = vld [vmem:[%s1560 + $0xa0] sm:$0xff]
        %v1582 = vld [vmem:[%s1560 + $0xa8] sm:$0xff]
        %v1583 = vld [vmem:[%s1560 + $0xb0] sm:$0xff]
        %v1584 = vld [vmem:[%s1560 + $0xb8] sm:$0xff]
        %v1585 = vld [vmem:[%s1560 + $0xc0] sm:$0xff]
        %v1586 = vld [vmem:[%s1560 + $0xc8] sm:$0xff]
        %v1587 = vld [vmem:[%s1560 + $0xd0] sm:$0xff]
        %v1588 = vld [vmem:[%s1560 + $0xd8] sm:$0xff]
        %v1589 = vld [vmem:[%s1560 + $0xe0] sm:$0xff]
        %v1590 = vld [vmem:[%s1560 + $0xe8] sm:$0xff]
        %v1591 = vld [vmem:[%s1560 + $0xf0] sm:$0xff]
        %v1592 = vld [vmem:[%s1560 + $0xf8] sm:$0xff]
        %v1593 = vld [vmem:[%s1560 + $0x100] sm:$0xff]
        %v1594 = vld [vmem:[%s1560 + $0x108] sm:$0xff]
        %v1595 = vld [vmem:[%s1560 + $0x110] sm:$0xff]
        %v1596 = vld [vmem:[%s1560 + $0x118] sm:$0xff]
        %v1597 = vsel %vm286, %v812, 0
        %v1599 = vsel %vm286, %v814, 0
        %v1601 = vsel %vm286, %v816, 0
        %v1603 = vsel %vm286, %v818, 0
        %v1605 = vsel %vm286, %v820, 0
        %v1607 = vsel %vm286, %v822, 0
        %v1609 = vsel %vm286, %v824, 0
        %v1611 = vsel %vm286, %v826, 0
        %1613 = vmatprep.subr.mxu0 0.0
        %1614 = vmatpush1.msra.mxu0 %v1576
        %1615 = vmatprep.subr.mxu0 0.0
        %1616 = vmatpush1.msra.mxu0 %v1575
        %1617 = vmatprep.subr.mxu0 0.0
        %1618 = vmatpush1.msra.mxu0 %v1574
        %1619 = vmatprep.subr.mxu0 0.0
        %1620 = vmatpush1.msra.mxu0 %v1573
        %1621 = vmatprep.subr.mxu0 0.0
        %1622 = vmatpush1.msra.mxu0 %v1572
        %1623 = vmatprep.subr.mxu0 0.0
        %1624 = vmatpush1.msra.mxu0 %v1571
        %1625 = vmatprep.subr.mxu0 0.0
        %1626 = vmatpush1.msra.mxu0 %v1570
        %1627 = vmatprep.subr.mxu0 0.0
        %1628 = vmatpush1.msra.mxu0 %v1569
        %1629 = vmatprep.subr.mxu0 0.0
        %1630 = vmatpush1.msra.mxu0 %v1568
        %1631 = vmatprep.subr.mxu0 0.0
        %1632 = vmatpush1.msra.mxu0 %v1567
        %1633 = vmatprep.subr.mxu0 0.0
        %1634 = vmatpush1.msra.mxu0 %v1566
        %1635 = vmatprep.subr.mxu0 0.0
        %1636 = vmatpush1.msra.mxu0 %v1565
        %1637 = vmatprep.subr.mxu0 0.0
        %1638 = vmatpush1.msra.mxu0 %v1564
        %1639 = vmatprep.subr.mxu0 0.0
        %1640 = vmatpush1.msra.mxu0 %v1563
        %1641 = vmatprep.subr.mxu0 0.0
        %1642 = vmatpush1.msra.mxu0 %v1562
        %1643 = vmatprep.subr.mxu0 0.0
        %1644 = vmatpush1.msra.mxu0 %v1561
        %1645 = vmatprep.subr.mxu0 0.0
        %1646 = vmatpush2.msra.mxu0 %v1592
        %1647 = vmatprep.subr.mxu0 0.0
        %1648 = vmatpush2.msra.mxu0 %v1591
        %1649 = vmatprep.subr.mxu0 0.0
        %1650 = vmatpush2.msra.mxu0 %v1590
        %1651 = vmatprep.subr.mxu0 0.0
        %1652 = vmatpush2.msra.mxu0 %v1589
        %1653 = vmatprep.subr.mxu0 0.0
        %1654 = vmatpush2.msra.mxu0 %v1588
        %1655 = vmatprep.subr.mxu0 0.0
        %1656 = vmatpush2.msra.mxu0 %v1587
        %1657 = vmatprep.subr.mxu0 0.0
        %1658 = vmatpush2.msra.mxu0 %v1586
        %1659 = vmatprep.subr.mxu0 0.0
        %1660 = vmatpush2.msra.mxu0 %v1585
        %1661 = vmatprep.subr.mxu0 0.0
        %1662 = vmatpush2.msra.mxu0 %v1584
        %1663 = vmatprep.subr.mxu0 0.0
        %1664 = vmatpush2.msra.mxu0 %v1583
        %1665 = vmatprep.subr.mxu0 0.0
        %1666 = vmatpush2.msra.mxu0 %v1582
        %1667 = vmatprep.subr.mxu0 0.0
        %1668 = vmatpush2.msra.mxu0 %v1581
        %1669 = vmatprep.subr.mxu0 0.0
        %1670 = vmatpush2.msra.mxu0 %v1580
        %1671 = vmatprep.subr.mxu0 0.0
        %1672 = vmatpush2.msra.mxu0 %v1579
        %1673 = vmatprep.subr.mxu0 0.0
        %1674 = vmatpush2.msra.mxu0 %v1578
        %1675 = vmatprep.subr.mxu0 0.0
        %1676 = vmatpush2.msra.mxu0 %v1577
        %1677 = vmatprep.mubr.f32.mxu0 %v844
        %1678 = vmatmul.mubr.f32.gmra.mxu0 %v836
        %v1679 = vpop.f32.mrf.mxu0
        %v1680 = vadd.f32 0.0, %v1679
        %v1681 = vpop.f32.mrf.mxu0
        %1682 = vmatprep.mubr.f32.mxu0 %v845
        %1683 = vmatmul.mubr.f32.gmra.mxu0 %v837
        %v1684 = vpop.f32.mrf.mxu0
        %v1685 = vadd.f32 0.0, %v1684
        %v1686 = vpop.f32.mrf.mxu0
        %1687 = vmatprep.mubr.f32.mxu0 %v846
        %1688 = vmatmul.mubr.f32.gmra.mxu0 %v838
        %v1689 = vpop.f32.mrf.mxu0
        %v1690 = vadd.f32 0.0, %v1689
        %v1691 = vpop.f32.mrf.mxu0
        %1692 = vmatprep.mubr.f32.mxu0 %v847
        %1693 = vmatmul.mubr.f32.gmra.mxu0 %v839
        %v1694 = vpop.f32.mrf.mxu0
        %v1695 = vadd.f32 0.0, %v1694
        %v1696 = vpop.f32.mrf.mxu0
        %1697 = vmatprep.mubr.f32.mxu0 %v848
        %1698 = vmatmul.mubr.f32.gmra.mxu0 %v840
        %v1699 = vpop.f32.mrf.mxu0
        %v1700 = vadd.f32 0.0, %v1699
        %v1701 = vpop.f32.mrf.mxu0
        %1702 = vmatprep.mubr.f32.mxu0 %v849
        %1703 = vmatmul.mubr.f32.gmra.mxu0 %v841
        %v1704 = vpop.f32.mrf.mxu0
        %v1705 = vadd.f32 0.0, %v1704
        %v1706 = vpop.f32.mrf.mxu0
        %1707 = vmatprep.mubr.f32.mxu0 %v850
        %1708 = vmatmul.mubr.f32.gmra.mxu0 %v842
        %v1709 = vpop.f32.mrf.mxu0
        %v1710 = vadd.f32 0.0, %v1709
        %v1711 = vpop.f32.mrf.mxu0
        %1712 = vmatprep.mubr.f32.mxu0 %v851
        %1713 = vmatmul.mubr.f32.gmra.mxu0 %v843
        %v1714 = vpop.f32.mrf.mxu0
        %v1715 = vadd.f32 0.0, %v1714
        %v1716 = vpop.f32.mrf.mxu0
        %1717 = vdwg.mxu0
        %1718 = vmatprep.subr.mxu0 0.0
        %1719 = vmatpush1.msra.mxu0 0.0
        %1720 = vmatprep.subr.mxu0 0.0
        %1721 = vmatpush1.msra.mxu0 0.0
        %1722 = vmatprep.subr.mxu0 0.0
        %1723 = vmatpush1.msra.mxu0 0.0
        %1724 = vmatprep.subr.mxu0 0.0
        %1725 = vmatpush1.msra.mxu0 0.0
        %1726 = vmatprep.subr.mxu0 0.0
        %1727 = vmatpush1.msra.mxu0 0.0
        %1728 = vmatprep.subr.mxu0 0.0
        %1729 = vmatpush1.msra.mxu0 0.0
        %1730 = vmatprep.subr.mxu0 0.0
        %1731 = vmatpush1.msra.mxu0 0.0
        %1732 = vmatprep.subr.mxu0 0.0
        %1733 = vmatpush1.msra.mxu0 0.0
        %1734 = vmatprep.subr.mxu0 0.0
        %1735 = vmatpush1.msra.mxu0 0.0
        %1736 = vmatprep.subr.mxu0 0.0
        %1737 = vmatpush1.msra.mxu0 0.0
        %1738 = vmatprep.subr.mxu0 0.0
        %1739 = vmatpush1.msra.mxu0 0.0
        %1740 = vmatprep.subr.mxu0 0.0
        %1741 = vmatpush1.msra.mxu0 0.0
        %1742 = vmatprep.subr.mxu0 0.0
        %1743 = vmatpush1.msra.mxu0 %v1596
        %1744 = vmatprep.subr.mxu0 0.0
        %1745 = vmatpush1.msra.mxu0 %v1595
        %1746 = vmatprep.subr.mxu0 0.0
        %1747 = vmatpush1.msra.mxu0 %v1594
        %1748 = vmatprep.subr.mxu0 0.0
        %1749 = vmatpush1.msra.mxu0 %v1593
        %1750 = vmatprep.subr.mxu0 0.0
        %1751 = vmatpush2.msra.mxu0 0.0
        %1752 = vmatprep.subr.mxu0 0.0
        %1753 = vmatpush2.msra.mxu0 0.0
        %1754 = vmatprep.subr.mxu0 0.0
        %1755 = vmatpush2.msra.mxu0 0.0
        %1756 = vmatprep.subr.mxu0 0.0
        %1757 = vmatpush2.msra.mxu0 0.0
        %1758 = vmatprep.subr.mxu0 0.0
        %1759 = vmatpush2.msra.mxu0 0.0
        %1760 = vmatprep.subr.mxu0 0.0
        %1761 = vmatpush2.msra.mxu0 0.0
        %1762 = vmatprep.subr.mxu0 0.0
        %1763 = vmatpush2.msra.mxu0 0.0
        %1764 = vmatprep.subr.mxu0 0.0
        %1765 = vmatpush2.msra.mxu0 0.0
        %1766 = vmatprep.subr.mxu0 0.0
        %1767 = vmatpush2.msra.mxu0 0.0
        %1768 = vmatprep.subr.mxu0 0.0
        %1769 = vmatpush2.msra.mxu0 0.0
        %1770 = vmatprep.subr.mxu0 0.0
        %1771 = vmatpush2.msra.mxu0 0.0
        %1772 = vmatprep.subr.mxu0 0.0
        %1773 = vmatpush2.msra.mxu0 0.0
        %1774 = vmatprep.subr.mxu0 0.0
        %1775 = vmatpush2.msra.mxu0 0.0
        %1776 = vmatprep.subr.mxu0 0.0
        %1777 = vmatpush2.msra.mxu0 0.0
        %1778 = vmatprep.subr.mxu0 0.0
        %1779 = vmatpush2.msra.mxu0 0.0
        %1780 = vmatprep.subr.mxu0 0.0
        %1781 = vmatpush2.msra.mxu0 0.0
        %1782 = vmatprep.mubr.f32.mxu0 0.0
        %1783 = vmatmul.mubr.f32.gmra.mxu0 %v1597
        %v1784 = vpop.f32.mrf.mxu0
        %v1785 = vadd.f32 %v1680, %v1784
        %v1786 = vpop.f32.mrf.mxu0
        %1787 = vmatprep.mubr.f32.mxu0 0.0
        %1788 = vmatmul.mubr.f32.gmra.mxu0 %v1599
        %v1789 = vpop.f32.mrf.mxu0
        %v1790 = vadd.f32 %v1685, %v1789
        %v1791 = vpop.f32.mrf.mxu0
        %1792 = vmatprep.mubr.f32.mxu0 0.0
        %1793 = vmatmul.mubr.f32.gmra.mxu0 %v1601
        %v1794 = vpop.f32.mrf.mxu0
        %v1795 = vadd.f32 %v1690, %v1794
        %v1796 = vpop.f32.mrf.mxu0
        %1797 = vmatprep.mubr.f32.mxu0 0.0
        %1798 = vmatmul.mubr.f32.gmra.mxu0 %v1603
        %v1799 = vpop.f32.mrf.mxu0
        %v1800 = vadd.f32 %v1695, %v1799
        %v1801 = vpop.f32.mrf.mxu0
        %1802 = vmatprep.mubr.f32.mxu0 0.0
        %1803 = vmatmul.mubr.f32.gmra.mxu0 %v1605
        %v1804 = vpop.f32.mrf.mxu0
        %v1805 = vadd.f32 %v1700, %v1804
        %v1806 = vpop.f32.mrf.mxu0
        %1807 = vmatprep.mubr.f32.mxu0 0.0
        %1808 = vmatmul.mubr.f32.gmra.mxu0 %v1607
        %v1809 = vpop.f32.mrf.mxu0
        %v1810 = vadd.f32 %v1705, %v1809
        %v1811 = vpop.f32.mrf.mxu0
        %1812 = vmatprep.mubr.f32.mxu0 0.0
        %1813 = vmatmul.mubr.f32.gmra.mxu0 %v1609
        %v1814 = vpop.f32.mrf.mxu0
        %v1815 = vadd.f32 %v1710, %v1814
        %v1816 = vpop.f32.mrf.mxu0
        %1817 = vmatprep.mubr.f32.mxu0 0.0
        %1818 = vmatmul.mubr.f32.gmra.mxu0 %v1611
        %v1819 = vpop.f32.mrf.mxu0
        %v1820 = vadd.f32 %v1715, %v1819
        %v1821 = vpop.f32.mrf.mxu0
        %1822 = vdwg.mxu0
        %v1823 = vadd.f32 %v1522, %v1785
        %v1824 = vadd.f32 %v1527, %v1790
        %v1825 = vadd.f32 %v1532, %v1795
        %v1826 = vadd.f32 %v1537, %v1800
        %v1827 = vadd.f32 %v1542, %v1805
        %v1828 = vadd.f32 %v1547, %v1810
        %v1829 = vadd.f32 %v1552, %v1815
        %v1830 = vadd.f32 %v1557, %v1820
        %v1831 = vld [vmem:[%s5] sm:$0x1]
        %v1833 = vlaneseq
        %v1834 = vshrl.u32 %v1833, 7
        %v1835 = vsub.s32 0, %v1834
        %v1836 = vrot.slane %v1831, %v1835
        %v1838 = vadd.f32 %v1823, %v1836
        %v1839 = vadd.f32 %v1824, %v1836
        %v1840 = vadd.f32 %v1825, %v1836
        %v1841 = vadd.f32 %v1826, %v1836
        %v1842 = vadd.f32 %v1827, %v1836
        %v1843 = vadd.f32 %v1828, %v1836
        %v1844 = vadd.f32 %v1829, %v1836
        %v1845 = vadd.f32 %v1830, %v1836
        %1846 = vst.msk [vmem:[%s268] sm:$0xff] %vm768, %v1838
        %1847 = vst.msk [vmem:[%s268 + $0x8] sm:$0xff] %vm768, %v1839
        %1848 = vst.msk [vmem:[%s268 + $0x10] sm:$0xff] %vm768, %v1840
        %1849 = vst.msk [vmem:[%s268 + $0x18] sm:$0xff] %vm768, %v1841
        %1850 = vst.msk [vmem:[%s268 + $0x20] sm:$0xff] %vm768, %v1842
        %1851 = vst.msk [vmem:[%s268 + $0x28] sm:$0xff] %vm768, %v1843
        %1852 = vst.msk [vmem:[%s268 + $0x30] sm:$0xff] %vm768, %v1844
        %1853 = vst.msk [vmem:[%s268 + $0x38] sm:$0xff] %vm768, %v1845
        %s1854 = sand.u32 %s175, 1
        %s1855 = scalar_lea.sflag [#allocation4], %s1854
        %s1856 = sand.u32 %s175, 1
        %s1857 = smul.addr %s1856, 64
        %s1858 = scalar_lea.vmem [#allocation3], %s1857
        // Predicated region
        $region57: #{tpu_custom_call.1} parent=43 // pred_check
          %p1859 = pneg %p185
        $region58: #{tpu_custom_call.1} parent=43 // pred_check_branch
          %1861 = sbr.rel (%p1859) target = $region60
        $region59: #{tpu_custom_call.1} parent=43 // pred_region
          %s1863 = ssub.s32 1024, 1024
          %1864 = vsyncadd %s1855, %s1863
          %s1865 = smul.addr %s25, 8
          %s1866 = smul.addr %s24, 32
          %s1867 = sadd.s32 %s1865, %s1866
          %s1868 = smul.addr %s1867, 128
          %s1869 = scalar_lea.hbm %s6, %s1868
          %s1870 = sshll.u32 %s1858, 4
          %s1871 = int_to_ptr.vmem [resolvable:$true] %s1870
          %1876 = dma.vmem_to_hbm [thread:$0]  %s1871, 1024, %s1869, %s1855, 128, 128, 8
        $region60: #{tpu_custom_call.1} parent=43 // pred_fallthru
          _
      $region44: #{tpu_custom_call.1} parent=5 // pred_fallthru
        _
      %p1877 = scmp.le.s32.totalorder 2, %s15
      // Predicated region
      $region61: #{tpu_custom_call.1} parent=5 // pred_check
        %p1878 = pneg %p1877
      $region62: #{tpu_custom_call.1} parent=5 // pred_check_branch
        %1880 = sbr.rel (%p1878) target = $region64
      $region63: #{tpu_custom_call.1} parent=5 // pred_region
        %s1881 = ssub.s32 %s15, 2
        // Predicated region
        $region65: #{tpu_custom_call.1} parent=63 // pred_check
          %p1882 = pneg %p191
        $region66: #{tpu_custom_call.1} parent=63 // pred_check_branch
          %1884 = sbr.rel (%p1882) target = $region68
        $region67: #{tpu_custom_call.1} parent=63 // pred_region
          %s1885 = sand.u32 %s176, 1
          %s1886 = scalar_lea.sflag [#allocation4], %s1885
          %s1887 = sand.u32 %s176, 1
          %s1888 = smul.addr %s1887, 64
          %s1889 = scalar_lea.vmem [#allocation3], %s1888
          %1890 = dma.done %s1886, 1024
        $region68: #{tpu_custom_call.1} parent=63 // pred_fallthru
          _
      $region64: #{tpu_custom_call.1} parent=5 // pred_fallthru
        _
    $region6: #{tpu_custom_call.1} parent=1 // loop_footer
      %s19 = sadd.s32 1, %s15
    $region7: #{tpu_custom_call.1} parent=1 // loop_footer_branch
      %14 = sbr.rel target = $region3
    $region8: #{tpu_custom_call.1} parent=1 // loop_exit
      _
    %1891 = vsyncpa [#allocation4], 1
    %s1892 = scalar_lea.sflag [#allocation4], 1
    %1893 = vsyncpa %s1892, 1

</llo_original>
